<compile_context>
chip_gen: v7x
topology: tpu7x:2x2x1
jax: 0.10.0
libtpu: 0.0.40
codegen_flags: <defaults>
</compile_context>

<pallas_src>
import functools

import jax
import jax.numpy as jnp
from jax.experimental import pallas as pl
from jax.experimental.pallas import tpu as pltpu


# ----------------------------------------------------------------------------
# Fused Pallas kernel: all RNN layers + final Linear in one gridless invocation.
# ----------------------------------------------------------------------------
def _fused_rnn_kernel(num_layers, seq_len, batch, hidden, *refs):
    """Ref layout:
      [0]              x_ref      (S*B, I)   sequence-major input (row = t*B + b)
      [1 + 3*l + 0]    w_ih_l     (In_l, H)  = W_ih_l^T
      [1 + 3*l + 1]    w_hh_l     (H, H)     = W_hh_l^T
      [1 + 3*l + 2]    bias_l     (1, H)     = b_ih_l + b_hh_l
      [1 + 3*L]        fc_w       (H, O)     = W_fc^T
      [2 + 3*L]        fc_b       (1, O)
      [3 + 3*L]        out_ref    (B, O)
    """
    x_ref = refs[0]
    layer_refs = refs[1:1 + 3 * num_layers]
    fc_w_ref = refs[1 + 3 * num_layers]
    fc_b_ref = refs[2 + 3 * num_layers]
    out_ref = refs[3 + 3 * num_layers]

    # Load all weights once (tiny; live in vregs/VMEM for the whole kernel).
    w_ih = [layer_refs[3 * l][...] for l in range(num_layers)]      # (In_l, H)
    w_hh = [layer_refs[3 * l + 1][...] for l in range(num_layers)]  # (H, H)
    bias = [layer_refs[3 * l + 2][...] for l in range(num_layers)]  # (1, H)

    # Hoisted, time-independent layer-0 input projection (+ folded bias):
    # one (S*B, I) x (I, H) MXU matmul instead of S tiny per-step matmuls.
    u0 = jnp.dot(x_ref[...], w_ih[0], preferred_element_type=jnp.float32) + bias[0]

    # Hidden state per layer; stays in vregs for the whole recurrence.
    h = [jnp.zeros((batch, hidden), jnp.float32) for _ in range(num_layers)]

    # Wavefront over diagonals d = t + l: at diagonal d, layer l advances to
    # step t = d - l.  Inputs for layer l at step t are layer (l-1)'s output at
    # step t, which was produced on the PREVIOUS diagonal -> read from `h`
    # (pre-diagonal snapshot) and commit all updates at diagonal end, so the
    # per-layer chains within a diagonal are independent (MXU/EUP overlap).
    for d in range(seq_len + num_layers - 1):
        new_h = list(h)
        for l in range(num_layers):
            t = d - l
            if 0 <= t < seq_len:
                if l == 0:
                    u_t = u0[t * batch:(t + 1) * batch, :]           # (B, H), static slice
                else:
                    u_t = jnp.dot(h[l - 1], w_ih[l],
                                  preferred_element_type=jnp.float32) + bias[l]
                new_h[l] = jnp.tanh(
                    u_t + jnp.dot(h[l], w_hh[l],
                                  preferred_element_type=jnp.float32))
        h = new_h

    # Final Linear on the last layer's final hidden state (never leaves vregs).
    out_ref[...] = (
        jnp.dot(h[-1], fc_w_ref[...], preferred_element_type=jnp.float32)
        + fc_b_ref[...]
    ).astype(out_ref.dtype)


# ----------------------------------------------------------------------------
# Wrapper
# ----------------------------------------------------------------------------
@jax.jit
def simple_rnn_forward(x_bsi, params):
    """Full forward: x_bsi is (batch, seq, input) like the PyTorch module."""
    B, S, I = x_bsi.shape
    num_layers = len(params["rnn_layers"])
    H = params["rnn_layers"][0]["w_hh_t"].shape[0]
    O = params["fc_w_t"].shape[1]

    # batch_first (B, S, I) -> sequence-major rows: row index = t*B + b.
    # (Tiny here; at scale, require time-major input or read x in-kernel.)
    x2d = jnp.transpose(x_bsi, (1, 0, 2)).reshape(S * B, I).astype(jnp.float32)

    inputs = [x2d]
    in_specs = [pl.BlockSpec((S * B, I), lambda: (0, 0))]
    for layer in params["rnn_layers"]:
        for name in ("w_ih_t", "w_hh_t", "bias"):
            arr = layer[name]
            inputs.append(arr)
            in_specs.append(pl.BlockSpec(arr.shape, lambda: (0, 0)))
    inputs.append(params["fc_w_t"])
    in_specs.append(pl.BlockSpec(params["fc_w_t"].shape, lambda: (0, 0)))
    inputs.append(params["fc_b"])
    in_specs.append(pl.BlockSpec(params["fc_b"].shape, lambda: (0, 0)))

    kernel = functools.partial(_fused_rnn_kernel, num_layers, S, B, H)
    return pl.pallas_call(
        kernel,
        out_shape=jax.ShapeDtypeStruct((B, O), jnp.float32),
        in_specs=in_specs,
        out_specs=pl.BlockSpec((B, O), lambda: (0, 0)),
    )(*inputs)


# ----------------------------------------------------------------------------
# Deterministic parameter init (PyTorch-style uniform(-1/sqrt(H), 1/sqrt(H)))
# ----------------------------------------------------------------------------
def init_params(key, input_size, hidden_size, num_layers, output_size):
    bound = 1.0 / jnp.sqrt(hidden_size)
    layers = []
    for l in range(num_layers):
        in_sz = input_size if l == 0 else hidden_size
        key, k1, k2, k3, k4 = jax.random.split(key, 5)
        w_ih = jax.random.uniform(k1, (hidden_size, in_sz), jnp.float32, -bound, bound)
        w_hh = jax.random.uniform(k2, (hidden_size, hidden_size), jnp.float32, -bound, bound)
        b_ih = jax.random.uniform(k3, (hidden_size,), jnp.float32, -bound, bound)
        b_hh = jax.random.uniform(k4, (hidden_size,), jnp.float32, -bound, bound)
        layers.append(dict(
            w_ih_t=w_ih.T,                        # (in_sz, H)
            w_hh_t=w_hh.T,                        # (H, H)
            bias=(b_ih + b_hh)[None, :],          # (1, H)  folded biases
        ))
    key, k5, k6 = jax.random.split(key, 3)
    fc_bound = 1.0 / jnp.sqrt(hidden_size)
    fc_w = jax.random.uniform(k5, (output_size, hidden_size), jnp.float32, -fc_bound, fc_bound)
    fc_b = jax.random.uniform(k6, (output_size,), jnp.float32, -fc_bound, fc_bound)
    return dict(rnn_layers=layers, fc_w_t=fc_w.T, fc_b=fc_b[None, :])


# ----------------------------------------------------------------------------
# Pure-JAX reference for a sanity check
# ----------------------------------------------------------------------------
def reference_forward(x_bsi, params):
    seq = jnp.transpose(x_bsi, (1, 0, 2)).astype(jnp.float32)
    for layer in params["rnn_layers"]:
        B = seq.shape[1]
        H = layer["w_hh_t"].shape[0]
        h = jnp.zeros((B, H), jnp.float32)
        outs = []
        for t in range(seq.shape[0]):
            h = jnp.tanh(seq[t] @ layer["w_ih_t"] + h @ layer["w_hh_t"] + layer["bias"])
            outs.append(h)
        seq = jnp.stack(outs, axis=0)
    return seq[-1] @ params["fc_w_t"] + params["fc_b"]


if __name__ == "__main__":
    # Small shapes consistent with the module's forward.
    batch, seq_len = 2, 8
    input_size, hidden_size, num_layers, output_size = 8, 32, 2, 4

    key = jax.random.PRNGKey(0)
    key, xk = jax.random.split(key)
    x = jax.random.normal(xk, (batch, seq_len, input_size), jnp.float32)

    params = init_params(key, input_size, hidden_size, num_layers, output_size)

    out = simple_rnn_forward(x, params)
    out = jax.block_until_ready(out)

    ref = reference_forward(x, params)
    assert out.shape == (batch, output_size)
    assert jnp.allclose(out, ref, atol=1e-4, rtol=1e-4), (out, ref)

    print("KERNEL_OK")
</pallas_src>

<mosaic_0001>
module attributes {stable_mosaic.version = 11 : i64} {
  func.func @_fused_rnn_kernel(%arg0: memref<16x8xf32, #tpu.memory_space<vmem>>, %arg1: memref<8x32xf32, #tpu.memory_space<vmem>>, %arg2: memref<32x32xf32, #tpu.memory_space<vmem>>, %arg3: memref<1x32xf32, #tpu.memory_space<vmem>>, %arg4: memref<32x32xf32, #tpu.memory_space<vmem>>, %arg5: memref<32x32xf32, #tpu.memory_space<vmem>>, %arg6: memref<1x32xf32, #tpu.memory_space<vmem>>, %arg7: memref<32x4xf32, #tpu.memory_space<vmem>>, %arg8: memref<1x4xf32, #tpu.memory_space<vmem>>, %arg9: memref<2x4xf32, #tpu.memory_space<vmem>>) attributes {dimension_semantics = [], scalar_prefetch = 0 : i64, scratch_operands = 0 : i64, tpu.core_type = #tpu.core_type<tc>} {
    %c0 = arith.constant 0 : index
    %c0_0 = arith.constant 0 : index
    %0 = vector.load %arg1[%c0, %c0_0] : memref<8x32xf32, #tpu.memory_space<vmem>>, vector<8x32xf32>
    %c0_1 = arith.constant 0 : index
    %c0_2 = arith.constant 0 : index
    %1 = vector.load %arg4[%c0_1, %c0_2] : memref<32x32xf32, #tpu.memory_space<vmem>>, vector<32x32xf32>
    %c0_3 = arith.constant 0 : index
    %c0_4 = arith.constant 0 : index
    %2 = vector.load %arg2[%c0_3, %c0_4] : memref<32x32xf32, #tpu.memory_space<vmem>>, vector<32x32xf32>
    %c0_5 = arith.constant 0 : index
    %c0_6 = arith.constant 0 : index
    %3 = vector.load %arg5[%c0_5, %c0_6] : memref<32x32xf32, #tpu.memory_space<vmem>>, vector<32x32xf32>
    %c0_7 = arith.constant 0 : index
    %c0_8 = arith.constant 0 : index
    %4 = vector.load %arg3[%c0_7, %c0_8] : memref<1x32xf32, #tpu.memory_space<vmem>>, vector<1x32xf32>
    %c0_9 = arith.constant 0 : index
    %c0_10 = arith.constant 0 : index
    %5 = vector.load %arg6[%c0_9, %c0_10] : memref<1x32xf32, #tpu.memory_space<vmem>>, vector<1x32xf32>
    %c0_11 = arith.constant 0 : index
    %c0_12 = arith.constant 0 : index
    %6 = vector.load %arg0[%c0_11, %c0_12] : memref<16x8xf32, #tpu.memory_space<vmem>>, vector<16x8xf32>
    %cst = arith.constant dense<0.000000e+00> : vector<16x32xf32>
    %7 = tpu.matmul %6, %0, %cst {dimension_numbers = #tpu.dot_dimension_numbers<[1], [0], [0], [1], [0, 0, 1, 1], [], []>} : vector<16x8xf32>, vector<8x32xf32>, vector<16x32xf32> -> vector<16x32xf32>
    %8 = vector.broadcast %4 : vector<1x32xf32> to vector<16x32xf32>
    %9 = arith.addf %7, %8 : vector<16x32xf32>
    %cst_13 = arith.constant 0.000000e+00 : f32
    %10 = vector.broadcast %cst_13 : f32 to vector<2x32xf32>
    %cst_14 = arith.constant 0.000000e+00 : f32
    %11 = vector.broadcast %cst_14 : f32 to vector<2x32xf32>
    %12 = vector.extract_strided_slice %9 {offsets = [0, 0], sizes = [2, 32], strides = [1, 1]} : vector<16x32xf32> to vector<2x32xf32>
    %cst_15 = arith.constant dense<0.000000e+00> : vector<2x32xf32>
    %13 = tpu.matmul %10, %2, %cst_15 {dimension_numbers = #tpu.dot_dimension_numbers<[1], [0], [0], [1], [0, 0, 1, 1], [], []>} : vector<2x32xf32>, vector<32x32xf32>, vector<2x32xf32> -> vector<2x32xf32>
    %14 = arith.addf %12, %13 : vector<2x32xf32>
    %15 = math.tanh %14 : vector<2x32xf32>
    %16 = vector.extract_strided_slice %9 {offsets = [2, 0], sizes = [2, 32], strides = [1, 1]} : vector<16x32xf32> to vector<2x32xf32>
    %cst_16 = arith.constant dense<0.000000e+00> : vector<2x32xf32>
    %17 = tpu.matmul %15, %2, %cst_16 {dimension_numbers = #tpu.dot_dimension_numbers<[1], [0], [0], [1], [0, 0, 1, 1], [], []>} : vector<2x32xf32>, vector<32x32xf32>, vector<2x32xf32> -> vector<2x32xf32>
    %18 = arith.addf %16, %17 : vector<2x32xf32>
    %19 = math.tanh %18 : vector<2x32xf32>
    %cst_17 = arith.constant dense<0.000000e+00> : vector<2x32xf32>
    %20 = tpu.matmul %15, %1, %cst_17 {dimension_numbers = #tpu.dot_dimension_numbers<[1], [0], [0], [1], [0, 0, 1, 1], [], []>} : vector<2x32xf32>, vector<32x32xf32>, vector<2x32xf32> -> vector<2x32xf32>
    %21 = vector.broadcast %5 : vector<1x32xf32> to vector<2x32xf32>
    %22 = arith.addf %20, %21 : vector<2x32xf32>
    %cst_18 = arith.constant dense<0.000000e+00> : vector<2x32xf32>
    %23 = tpu.matmul %11, %3, %cst_18 {dimension_numbers = #tpu.dot_dimension_numbers<[1], [0], [0], [1], [0, 0, 1, 1], [], []>} : vector<2x32xf32>, vector<32x32xf32>, vector<2x32xf32> -> vector<2x32xf32>
    %24 = arith.addf %22, %23 : vector<2x32xf32>
    %25 = math.tanh %24 : vector<2x32xf32>
    %26 = vector.extract_strided_slice %9 {offsets = [4, 0], sizes = [2, 32], strides = [1, 1]} : vector<16x32xf32> to vector<2x32xf32>
    %cst_19 = arith.constant dense<0.000000e+00> : vector<2x32xf32>
    %27 = tpu.matmul %19, %2, %cst_19 {dimension_numbers = #tpu.dot_dimension_numbers<[1], [0], [0], [1], [0, 0, 1, 1], [], []>} : vector<2x32xf32>, vector<32x32xf32>, vector<2x32xf32> -> vector<2x32xf32>
    %28 = arith.addf %26, %27 : vector<2x32xf32>
    %29 = math.tanh %28 : vector<2x32xf32>
    %cst_20 = arith.constant dense<0.000000e+00> : vector<2x32xf32>
    %30 = tpu.matmul %19, %1, %cst_20 {dimension_numbers = #tpu.dot_dimension_numbers<[1], [0], [0], [1], [0, 0, 1, 1], [], []>} : vector<2x32xf32>, vector<32x32xf32>, vector<2x32xf32> -> vector<2x32xf32>
    %31 = vector.broadcast %5 : vector<1x32xf32> to vector<2x32xf32>
    %32 = arith.addf %30, %31 : vector<2x32xf32>
    %cst_21 = arith.constant dense<0.000000e+00> : vector<2x32xf32>
    %33 = tpu.matmul %25, %3, %cst_21 {dimension_numbers = #tpu.dot_dimension_numbers<[1], [0], [0], [1], [0, 0, 1, 1], [], []>} : vector<2x32xf32>, vector<32x32xf32>, vector<2x32xf32> -> vector<2x32xf32>
    %34 = arith.addf %32, %33 : vector<2x32xf32>
    %35 = math.tanh %34 : vector<2x32xf32>
    %36 = vector.extract_strided_slice %9 {offsets = [6, 0], sizes = [2, 32], strides = [1, 1]} : vector<16x32xf32> to vector<2x32xf32>
    %cst_22 = arith.constant dense<0.000000e+00> : vector<2x32xf32>
    %37 = tpu.matmul %29, %2, %cst_22 {dimension_numbers = #tpu.dot_dimension_numbers<[1], [0], [0], [1], [0, 0, 1, 1], [], []>} : vector<2x32xf32>, vector<32x32xf32>, vector<2x32xf32> -> vector<2x32xf32>
    %38 = arith.addf %36, %37 : vector<2x32xf32>
    %39 = math.tanh %38 : vector<2x32xf32>
    %cst_23 = arith.constant dense<0.000000e+00> : vector<2x32xf32>
    %40 = tpu.matmul %29, %1, %cst_23 {dimension_numbers = #tpu.dot_dimension_numbers<[1], [0], [0], [1], [0, 0, 1, 1], [], []>} : vector<2x32xf32>, vector<32x32xf32>, vector<2x32xf32> -> vector<2x32xf32>
    %41 = vector.broadcast %5 : vector<1x32xf32> to vector<2x32xf32>
    %42 = arith.addf %40, %41 : vector<2x32xf32>
    %cst_24 = arith.constant dense<0.000000e+00> : vector<2x32xf32>
    %43 = tpu.matmul %35, %3, %cst_24 {dimension_numbers = #tpu.dot_dimension_numbers<[1], [0], [0], [1], [0, 0, 1, 1], [], []>} : vector<2x32xf32>, vector<32x32xf32>, vector<2x32xf32> -> vector<2x32xf32>
    %44 = arith.addf %42, %43 : vector<2x32xf32>
    %45 = math.tanh %44 : vector<2x32xf32>
    %46 = vector.extract_strided_slice %9 {offsets = [8, 0], sizes = [2, 32], strides = [1, 1]} : vector<16x32xf32> to vector<2x32xf32>
    %cst_25 = arith.constant dense<0.000000e+00> : vector<2x32xf32>
    %47 = tpu.matmul %39, %2, %cst_25 {dimension_numbers = #tpu.dot_dimension_numbers<[1], [0], [0], [1], [0, 0, 1, 1], [], []>} : vector<2x32xf32>, vector<32x32xf32>, vector<2x32xf32> -> vector<2x32xf32>
    %48 = arith.addf %46, %47 : vector<2x32xf32>
    %49 = math.tanh %48 : vector<2x32xf32>
    %cst_26 = arith.constant dense<0.000000e+00> : vector<2x32xf32>
    %50 = tpu.matmul %39, %1, %cst_26 {dimension_numbers = #tpu.dot_dimension_numbers<[1], [0], [0], [1], [0, 0, 1, 1], [], []>} : vector<2x32xf32>, vector<32x32xf32>, vector<2x32xf32> -> vector<2x32xf32>
    %51 = vector.broadcast %5 : vector<1x32xf32> to vector<2x32xf32>
    %52 = arith.addf %50, %51 : vector<2x32xf32>
    %cst_27 = arith.constant dense<0.000000e+00> : vector<2x32xf32>
    %53 = tpu.matmul %45, %3, %cst_27 {dimension_numbers = #tpu.dot_dimension_numbers<[1], [0], [0], [1], [0, 0, 1, 1], [], []>} : vector<2x32xf32>, vector<32x32xf32>, vector<2x32xf32> -> vector<2x32xf32>
    %54 = arith.addf %52, %53 : vector<2x32xf32>
    %55 = math.tanh %54 : vector<2x32xf32>
    %56 = vector.extract_strided_slice %9 {offsets = [10, 0], sizes = [2, 32], strides = [1, 1]} : vector<16x32xf32> to vector<2x32xf32>
    %cst_28 = arith.constant dense<0.000000e+00> : vector<2x32xf32>
    %57 = tpu.matmul %49, %2, %cst_28 {dimension_numbers = #tpu.dot_dimension_numbers<[1], [0], [0], [1], [0, 0, 1, 1], [], []>} : vector<2x32xf32>, vector<32x32xf32>, vector<2x32xf32> -> vector<2x32xf32>
    %58 = arith.addf %56, %57 : vector<2x32xf32>
    %59 = math.tanh %58 : vector<2x32xf32>
    %cst_29 = arith.constant dense<0.000000e+00> : vector<2x32xf32>
    %60 = tpu.matmul %49, %1, %cst_29 {dimension_numbers = #tpu.dot_dimension_numbers<[1], [0], [0], [1], [0, 0, 1, 1], [], []>} : vector<2x32xf32>, vector<32x32xf32>, vector<2x32xf32> -> vector<2x32xf32>
    %61 = vector.broadcast %5 : vector<1x32xf32> to vector<2x32xf32>
    %62 = arith.addf %60, %61 : vector<2x32xf32>
    %cst_30 = arith.constant dense<0.000000e+00> : vector<2x32xf32>
    %63 = tpu.matmul %55, %3, %cst_30 {dimension_numbers = #tpu.dot_dimension_numbers<[1], [0], [0], [1], [0, 0, 1, 1], [], []>} : vector<2x32xf32>, vector<32x32xf32>, vector<2x32xf32> -> vector<2x32xf32>
    %64 = arith.addf %62, %63 : vector<2x32xf32>
    %65 = math.tanh %64 : vector<2x32xf32>
    %66 = vector.extract_strided_slice %9 {offsets = [12, 0], sizes = [2, 32], strides = [1, 1]} : vector<16x32xf32> to vector<2x32xf32>
    %cst_31 = arith.constant dense<0.000000e+00> : vector<2x32xf32>
    %67 = tpu.matmul %59, %2, %cst_31 {dimension_numbers = #tpu.dot_dimension_numbers<[1], [0], [0], [1], [0, 0, 1, 1], [], []>} : vector<2x32xf32>, vector<32x32xf32>, vector<2x32xf32> -> vector<2x32xf32>
    %68 = arith.addf %66, %67 : vector<2x32xf32>
    %69 = math.tanh %68 : vector<2x32xf32>
    %cst_32 = arith.constant dense<0.000000e+00> : vector<2x32xf32>
    %70 = tpu.matmul %59, %1, %cst_32 {dimension_numbers = #tpu.dot_dimension_numbers<[1], [0], [0], [1], [0, 0, 1, 1], [], []>} : vector<2x32xf32>, vector<32x32xf32>, vector<2x32xf32> -> vector<2x32xf32>
    %71 = vector.broadcast %5 : vector<1x32xf32> to vector<2x32xf32>
    %72 = arith.addf %70, %71 : vector<2x32xf32>
    %cst_33 = arith.constant dense<0.000000e+00> : vector<2x32xf32>
    %73 = tpu.matmul %65, %3, %cst_33 {dimension_numbers = #tpu.dot_dimension_numbers<[1], [0], [0], [1], [0, 0, 1, 1], [], []>} : vector<2x32xf32>, vector<32x32xf32>, vector<2x32xf32> -> vector<2x32xf32>
    %74 = arith.addf %72, %73 : vector<2x32xf32>
    %75 = math.tanh %74 : vector<2x32xf32>
    %76 = vector.extract_strided_slice %9 {offsets = [14, 0], sizes = [2, 32], strides = [1, 1]} : vector<16x32xf32> to vector<2x32xf32>
    %cst_34 = arith.constant dense<0.000000e+00> : vector<2x32xf32>
    %77 = tpu.matmul %69, %2, %cst_34 {dimension_numbers = #tpu.dot_dimension_numbers<[1], [0], [0], [1], [0, 0, 1, 1], [], []>} : vector<2x32xf32>, vector<32x32xf32>, vector<2x32xf32> -> vector<2x32xf32>
    %78 = arith.addf %76, %77 : vector<2x32xf32>
    %79 = math.tanh %78 : vector<2x32xf32>
    %cst_35 = arith.constant dense<0.000000e+00> : vector<2x32xf32>
    %80 = tpu.matmul %69, %1, %cst_35 {dimension_numbers = #tpu.dot_dimension_numbers<[1], [0], [0], [1], [0, 0, 1, 1], [], []>} : vector<2x32xf32>, vector<32x32xf32>, vector<2x32xf32> -> vector<2x32xf32>
    %81 = vector.broadcast %5 : vector<1x32xf32> to vector<2x32xf32>
    %82 = arith.addf %80, %81 : vector<2x32xf32>
    %cst_36 = arith.constant dense<0.000000e+00> : vector<2x32xf32>
    %83 = tpu.matmul %75, %3, %cst_36 {dimension_numbers = #tpu.dot_dimension_numbers<[1], [0], [0], [1], [0, 0, 1, 1], [], []>} : vector<2x32xf32>, vector<32x32xf32>, vector<2x32xf32> -> vector<2x32xf32>
    %84 = arith.addf %82, %83 : vector<2x32xf32>
    %85 = math.tanh %84 : vector<2x32xf32>
    %cst_37 = arith.constant dense<0.000000e+00> : vector<2x32xf32>
    %86 = tpu.matmul %79, %1, %cst_37 {dimension_numbers = #tpu.dot_dimension_numbers<[1], [0], [0], [1], [0, 0, 1, 1], [], []>} : vector<2x32xf32>, vector<32x32xf32>, vector<2x32xf32> -> vector<2x32xf32>
    %87 = vector.broadcast %5 : vector<1x32xf32> to vector<2x32xf32>
    %88 = arith.addf %86, %87 : vector<2x32xf32>
    %cst_38 = arith.constant dense<0.000000e+00> : vector<2x32xf32>
    %89 = tpu.matmul %85, %3, %cst_38 {dimension_numbers = #tpu.dot_dimension_numbers<[1], [0], [0], [1], [0, 0, 1, 1], [], []>} : vector<2x32xf32>, vector<32x32xf32>, vector<2x32xf32> -> vector<2x32xf32>
    %90 = arith.addf %88, %89 : vector<2x32xf32>
    %91 = math.tanh %90 : vector<2x32xf32>
    %c0_39 = arith.constant 0 : index
    %c0_40 = arith.constant 0 : index
    %92 = vector.load %arg7[%c0_39, %c0_40] : memref<32x4xf32, #tpu.memory_space<vmem>>, vector<32x4xf32>
    %cst_41 = arith.constant dense<0.000000e+00> : vector<2x4xf32>
    %93 = tpu.matmul %91, %92, %cst_41 {dimension_numbers = #tpu.dot_dimension_numbers<[1], [0], [0], [1], [0, 0, 1, 1], [], []>} : vector<2x32xf32>, vector<32x4xf32>, vector<2x4xf32> -> vector<2x4xf32>
    %c0_42 = arith.constant 0 : index
    %c0_43 = arith.constant 0 : index
    %94 = vector.load %arg8[%c0_42, %c0_43] : memref<1x4xf32, #tpu.memory_space<vmem>>, vector<1x4xf32>
    %95 = vector.broadcast %94 : vector<1x4xf32> to vector<2x4xf32>
    %96 = arith.addf %93, %95 : vector<2x4xf32>
    %c0_44 = arith.constant 0 : index
    %c0_45 = arith.constant 0 : index
    %97 = vector.load %arg9[%c0_44, %c0_45] : memref<2x4xf32, #tpu.memory_space<vmem>>, vector<2x4xf32>
    tpu.vector_store %arg9[%c0_44, %c0_45], %96 {strides = array<i32>} : memref<2x4xf32, #tpu.memory_space<vmem>>, vector<2x4xf32>,
    return
  }
}

</mosaic_0001>

<llo_original>
// kernel: simple_rnn_forward.1
$region0: #{simple_rnn_forward.1}
  #allocation0 [shape = 'u32[]', space=smem, size = 0x4, offset = 0x4, fixed_abs, tag = 'smem constant byte address 0x4 - core index']
  #allocation1 [shape = 'u32[144,128]{1,0:T(1,128)}', space=vmem, size = 0x12000, scoped, tag = 'internal scratch']
  %s0 = inlined_call_operand.vmem [shape: f32[16,8], index: 0, kind: input, shape index: {}]
  %s1 = inlined_call_operand.hbm [shape: f32[8,32], index: 1, kind: input, shape index: {}]
  %s2 = inlined_call_operand.vmem [shape: f32[32,32], index: 2, kind: input, shape index: {}]
  %s3 = inlined_call_operand.vmem [shape: f32[1,32], index: 3, kind: input, shape index: {}]
  %s4 = inlined_call_operand.vmem [shape: f32[32,32], index: 4, kind: input, shape index: {}]
  %s5 = inlined_call_operand.vmem [shape: f32[32,32], index: 5, kind: input, shape index: {}]
  %s6 = inlined_call_operand.vmem [shape: f32[1,32], index: 6, kind: input, shape index: {}]
  %s7 = inlined_call_operand.vmem [shape: f32[32,4], index: 7, kind: input, shape index: {}]
  %s8 = inlined_call_operand.hbm [shape: f32[1,4], index: 8, kind: input, shape index: {}]
  %s9 = inlined_call_operand.hbm [shape: f32[2,4], index: 9, kind: output, shape index: {}]
  %s10 = sld [smem:[#allocation0]]
  $region54: #{simple_rnn_forward.1} parent=0
    _
  %s12 = ssub.s32 1, %s10
  %s13 = scalar_select 0, %s12, %s10
  $region1: #{simple_rnn_forward.1} parent=0
    #allocation2 [shape = 'u8[4096]{0}', space=vmem, size = 0x1000, scoped, tag = 'input window, operand 1, single buffered']
    #allocation3 [shape = 's32[1]{0}', space=sflag, size = 0x4, scoped, tag = 'scoped memory for simple_rnn_forward.1']
    #allocation4 [shape = 's32[1]{0}', space=sflag, size = 0x4, scoped, tag = 'scoped memory for simple_rnn_forward.1']
    #allocation5 [shape = 'u8[512]{0}', space=vmem, size = 0x400, scoped, tag = 'input window, operand 8, single buffered']
    #allocation6 [shape = 's32[1]{0}', space=sflag, size = 0x4, scoped, tag = 'scoped memory for simple_rnn_forward.1']
    #allocation7 [shape = 'u8[1024]{0}', space=vmem, size = 0x400, scoped, tag = 'output window, operand 0, single buffered']
    %14 = vsyncpa [#allocation3], 0
    %15 = vsyncpa [#allocation6], 0
    %16 = vsyncpa [#allocation4], 0
    // Predicated region
    $region2: #{simple_rnn_forward.1} parent=1 // pred_check
      _
    $region3: #{simple_rnn_forward.1} parent=1 // pred_check_branch
      %18 = sbr.rel (0) target = $region5
    $region4: #{simple_rnn_forward.1} parent=1 // pred_region
      _
    $region5: #{simple_rnn_forward.1} parent=1 // pred_fallthru
      _
    // Predicated region
    $region6: #{simple_rnn_forward.1} parent=1 // pred_check
      _
    $region7: #{simple_rnn_forward.1} parent=1 // pred_check_branch
      %20 = sbr.rel (0) target = $region9
    $region8: #{simple_rnn_forward.1} parent=1 // pred_region
      %s22 = ssub.s32 128, 128
      %23 = vsyncadd [#allocation3], %s22
      %s25 = sshll.u32 [#allocation2], 4
      %s26 = int_to_ptr.vmem [resolvable:$true] %s25
      %28 = dma.hbm_to_vmem [thread:$0]  %s1, 128, %s26, [#allocation3]
    $region9: #{simple_rnn_forward.1} parent=1 // pred_fallthru
      _
    // Predicated region
    $region10: #{simple_rnn_forward.1} parent=1 // pred_check
      _
    $region11: #{simple_rnn_forward.1} parent=1 // pred_check_branch
      %30 = sbr.rel (0) target = $region13
    $region12: #{simple_rnn_forward.1} parent=1 // pred_region
      _
    $region13: #{simple_rnn_forward.1} parent=1 // pred_fallthru
      _
    // Predicated region
    $region14: #{simple_rnn_forward.1} parent=1 // pred_check
      _
    $region15: #{simple_rnn_forward.1} parent=1 // pred_check_branch
      %32 = sbr.rel (0) target = $region17
    $region16: #{simple_rnn_forward.1} parent=1 // pred_region
      _
    $region17: #{simple_rnn_forward.1} parent=1 // pred_fallthru
      _
    // Predicated region
    $region18: #{simple_rnn_forward.1} parent=1 // pred_check
      _
    $region19: #{simple_rnn_forward.1} parent=1 // pred_check_branch
      %34 = sbr.rel (0) target = $region21
    $region20: #{simple_rnn_forward.1} parent=1 // pred_region
      _
    $region21: #{simple_rnn_forward.1} parent=1 // pred_fallthru
      _
    // Predicated region
    $region22: #{simple_rnn_forward.1} parent=1 // pred_check
      _
    $region23: #{simple_rnn_forward.1} parent=1 // pred_check_branch
      %36 = sbr.rel (0) target = $region25
    $region24: #{simple_rnn_forward.1} parent=1 // pred_region
      _
    $region25: #{simple_rnn_forward.1} parent=1 // pred_fallthru
      _
    // Predicated region
    $region26: #{simple_rnn_forward.1} parent=1 // pred_check
      _
    $region27: #{simple_rnn_forward.1} parent=1 // pred_check_branch
      %38 = sbr.rel (0) target = $region29
    $region28: #{simple_rnn_forward.1} parent=1 // pred_region
      _
    $region29: #{simple_rnn_forward.1} parent=1 // pred_fallthru
      _
    // Predicated region
    $region30: #{simple_rnn_forward.1} parent=1 // pred_check
      _
    $region31: #{simple_rnn_forward.1} parent=1 // pred_check_branch
      %40 = sbr.rel (0) target = $region33
    $region32: #{simple_rnn_forward.1} parent=1 // pred_region
      _
    $region33: #{simple_rnn_forward.1} parent=1 // pred_fallthru
      _
    // Predicated region
    $region34: #{simple_rnn_forward.1} parent=1 // pred_check
      _
    $region35: #{simple_rnn_forward.1} parent=1 // pred_check_branch
      %42 = sbr.rel (0) target = $region37
    $region36: #{simple_rnn_forward.1} parent=1 // pred_region
      %s44 = ssub.s32 16, 16
      %45 = vsyncadd [#allocation6], %s44
      %s47 = sshll.u32 [#allocation5], 4
      %s48 = int_to_ptr.vmem [resolvable:$true] %s47
      %50 = dma.hbm_to_vmem [thread:$0]  %s8, 16, %s48, [#allocation6]
    $region37: #{simple_rnn_forward.1} parent=1 // pred_fallthru
      _
    // Predicated region
    $region38: #{simple_rnn_forward.1} parent=1 // pred_check
      _
    $region39: #{simple_rnn_forward.1} parent=1 // pred_check_branch
      %52 = sbr.rel (0) target = $region41
    $region40: #{simple_rnn_forward.1} parent=1 // pred_region
      %53 = dma.done [#allocation3], 128
    $region41: #{simple_rnn_forward.1} parent=1 // pred_fallthru
      _
    // Predicated region
    $region42: #{simple_rnn_forward.1} parent=1 // pred_check
      _
    $region43: #{simple_rnn_forward.1} parent=1 // pred_check_branch
      %55 = sbr.rel (0) target = $region45
    $region44: #{simple_rnn_forward.1} parent=1 // pred_region
      %56 = dma.done [#allocation6], 16
    $region45: #{simple_rnn_forward.1} parent=1 // pred_fallthru
      _
    %v57 = vld [vmem:[#allocation2] sm:$0xff]
    %v58 = vld [vmem:[%s4] sm:$0xff]
    %v59 = vld [vmem:[%s4 + $0x8] sm:$0xff]
    %v60 = vld [vmem:[%s4 + $0x10] sm:$0xff]
    %v61 = vld [vmem:[%s4 + $0x18] sm:$0xff]
    %v62 = vld [vmem:[%s2] sm:$0xff]
    %v63 = vld [vmem:[%s2 + $0x8] sm:$0xff]
    %v64 = vld [vmem:[%s2 + $0x10] sm:$0xff]
    %v65 = vld [vmem:[%s2 + $0x18] sm:$0xff]
    %v66 = vld [vmem:[%s5] sm:$0xff]
    %v67 = vld [vmem:[%s5 + $0x8] sm:$0xff]
    %v68 = vld [vmem:[%s5 + $0x10] sm:$0xff]
    %v69 = vld [vmem:[%s5 + $0x18] sm:$0xff]
    %v70 = vld [vmem:[%s3] sm:$0x1]
    %v71 = vld [vmem:[%s6] sm:$0x1]
    %v72 = vld [vmem:[%s0] sm:$0xff]
    %v73 = vld [vmem:[%s0 + $0x8] sm:$0xff]
    %v75 = vlaneseq
    %v76 = vshrl.u32 %v75, 7
    %v77 = vsub.s32 0, %v76
    %v78 = vrot.slane %v70, %v77
    %vm80 = vcmask 64512
    %v82 = vsel %vm80, %v72, 0
    %v85 = vsel %vm80, %v73, 0
    %87 = vmatprep.subr.mxu0 0.0
    %88 = vmatpush1.msra.mxu0 %v57
    %89 = vmatprep.subr.mxu0 0.0
    %90 = vmatpush1.msra.mxu0 0.0
    %91 = vmatprep.subr.mxu0 0.0
    %92 = vmatpush1.msra.mxu0 0.0
    %93 = vmatprep.subr.mxu0 0.0
    %94 = vmatpush1.msra.mxu0 0.0
    %95 = vmatprep.subr.mxu0 0.0
    %96 = vmatpush1.msra.mxu0 0.0
    %97 = vmatprep.subr.mxu0 0.0
    %98 = vmatpush1.msra.mxu0 0.0
    %99 = vmatprep.subr.mxu0 0.0
    %100 = vmatpush1.msra.mxu0 0.0
    %101 = vmatprep.subr.mxu0 0.0
    %102 = vmatpush1.msra.mxu0 0.0
    %103 = vmatprep.subr.mxu0 0.0
    %104 = vmatpush1.msra.mxu0 0.0
    %105 = vmatprep.subr.mxu0 0.0
    %106 = vmatpush1.msra.mxu0 0.0
    %107 = vmatprep.subr.mxu0 0.0
    %108 = vmatpush1.msra.mxu0 0.0
    %109 = vmatprep.subr.mxu0 0.0
    %110 = vmatpush1.msra.mxu0 0.0
    %111 = vmatprep.subr.mxu0 0.0
    %112 = vmatpush1.msra.mxu0 0.0
    %113 = vmatprep.subr.mxu0 0.0
    %114 = vmatpush1.msra.mxu0 0.0
    %115 = vmatprep.subr.mxu0 0.0
    %116 = vmatpush1.msra.mxu0 0.0
    %117 = vmatprep.subr.mxu0 0.0
    %118 = vmatpush1.msra.mxu0 0.0
    %119 = vmatprep.subr.mxu0 0.0
    %120 = vmatpush1.msra.mxu0 0.0
    %121 = vmatprep.subr.mxu0 0.0
    %122 = vmatpush1.msra.mxu0 0.0
    %123 = vmatprep.subr.mxu0 0.0
    %124 = vmatpush1.msra.mxu0 0.0
    %125 = vmatprep.subr.mxu0 0.0
    %126 = vmatpush1.msra.mxu0 0.0
    %127 = vmatprep.subr.mxu0 0.0
    %128 = vmatpush1.msra.mxu0 0.0
    %129 = vmatprep.subr.mxu0 0.0
    %130 = vmatpush1.msra.mxu0 0.0
    %131 = vmatprep.subr.mxu0 0.0
    %132 = vmatpush1.msra.mxu0 0.0
    %133 = vmatprep.subr.mxu0 0.0
    %134 = vmatpush1.msra.mxu0 0.0
    %135 = vmatprep.subr.mxu0 0.0
    %136 = vmatpush1.msra.mxu0 0.0
    %137 = vmatprep.subr.mxu0 0.0
    %138 = vmatpush1.msra.mxu0 0.0
    %139 = vmatprep.subr.mxu0 0.0
    %140 = vmatpush1.msra.mxu0 0.0
    %141 = vmatprep.subr.mxu0 0.0
    %142 = vmatpush1.msra.mxu0 0.0
    %143 = vmatprep.subr.mxu0 0.0
    %144 = vmatpush1.msra.mxu0 0.0
    %145 = vmatprep.subr.mxu0 0.0
    %146 = vmatpush1.msra.mxu0 0.0
    %147 = vmatprep.subr.mxu0 0.0
    %148 = vmatpush1.msra.mxu0 0.0
    %149 = vmatprep.subr.mxu0 0.0
    %150 = vmatpush1.msra.mxu0 0.0
    %151 = vmatprep.mubr.f32.mxu0 0.0
    %152 = vmatmul.mubr.f32.gmra.mrb[0].mxu0 %v82
    %v153 = vpop.f32.mrb[0].mxu0
    %v154 = vadd.f32 %v78, %v153
    %v155 = vpop.f32.mrb[0].mxu0
    %156 = vmatprep.mubr.f32.mxu0 0.0
    %157 = vmatmul.mubr.f32.gmra.mrb[0].mxu0 %v85
    %v158 = vpop.f32.mrb[0].mxu0
    %v159 = vadd.f32 %v78, %v158
    %v160 = vpop.f32.mrb[0].mxu0
    %161 = vdwg.mxu0
    %vm162 = vcmask 261120
    %v164 = vsel %vm162, 0.0, 0
    %166 = vmatprep.subr.mxu0 0.0
    %167 = vmatpush1.msra.mxu0 %v62
    %168 = vmatprep.subr.mxu0 0.0
    %169 = vmatpush1.msra.mxu0 %v63
    %170 = vmatprep.subr.mxu0 0.0
    %171 = vmatpush1.msra.mxu0 %v64
    %172 = vmatprep.subr.mxu0 0.0
    %173 = vmatpush1.msra.mxu0 %v65
    %174 = vmatprep.subr.mxu0 0.0
    %175 = vmatpush1.msra.mxu0 0.0
    %176 = vmatprep.subr.mxu0 0.0
    %177 = vmatpush1.msra.mxu0 0.0
    %178 = vmatprep.subr.mxu0 0.0
    %179 = vmatpush1.msra.mxu0 0.0
    %180 = vmatprep.subr.mxu0 0.0
    %181 = vmatpush1.msra.mxu0 0.0
    %182 = vmatprep.subr.mxu0 0.0
    %183 = vmatpush1.msra.mxu0 0.0
    %184 = vmatprep.subr.mxu0 0.0
    %185 = vmatpush1.msra.mxu0 0.0
    %186 = vmatprep.subr.mxu0 0.0
    %187 = vmatpush1.msra.mxu0 0.0
    %188 = vmatprep.subr.mxu0 0.0
    %189 = vmatpush1.msra.mxu0 0.0
    %190 = vmatprep.subr.mxu0 0.0
    %191 = vmatpush1.msra.mxu0 0.0
    %192 = vmatprep.subr.mxu0 0.0
    %193 = vmatpush1.msra.mxu0 0.0
    %194 = vmatprep.subr.mxu0 0.0
    %195 = vmatpush1.msra.mxu0 0.0
    %196 = vmatprep.subr.mxu0 0.0
    %197 = vmatpush1.msra.mxu0 0.0
    %198 = vmatprep.subr.mxu0 0.0
    %199 = vmatpush1.msra.mxu0 0.0
    %200 = vmatprep.subr.mxu0 0.0
    %201 = vmatpush1.msra.mxu0 0.0
    %202 = vmatprep.subr.mxu0 0.0
    %203 = vmatpush1.msra.mxu0 0.0
    %204 = vmatprep.subr.mxu0 0.0
    %205 = vmatpush1.msra.mxu0 0.0
    %206 = vmatprep.subr.mxu0 0.0
    %207 = vmatpush1.msra.mxu0 0.0
    %208 = vmatprep.subr.mxu0 0.0
    %209 = vmatpush1.msra.mxu0 0.0
    %210 = vmatprep.subr.mxu0 0.0
    %211 = vmatpush1.msra.mxu0 0.0
    %212 = vmatprep.subr.mxu0 0.0
    %213 = vmatpush1.msra.mxu0 0.0
    %214 = vmatprep.subr.mxu0 0.0
    %215 = vmatpush1.msra.mxu0 0.0
    %216 = vmatprep.subr.mxu0 0.0
    %217 = vmatpush1.msra.mxu0 0.0
    %218 = vmatprep.subr.mxu0 0.0
    %219 = vmatpush1.msra.mxu0 0.0
    %220 = vmatprep.subr.mxu0 0.0
    %221 = vmatpush1.msra.mxu0 0.0
    %222 = vmatprep.subr.mxu0 0.0
    %223 = vmatpush1.msra.mxu0 0.0
    %224 = vmatprep.subr.mxu0 0.0
    %225 = vmatpush1.msra.mxu0 0.0
    %226 = vmatprep.subr.mxu0 0.0
    %227 = vmatpush1.msra.mxu0 0.0
    %228 = vmatprep.subr.mxu0 0.0
    %229 = vmatpush1.msra.mxu0 0.0
    %230 = vmatprep.mubr.f32.mxu0 0.0
    %231 = vmatmul.mubr.f32.gmra.mrb[0].mxu0 %v164
    %v232 = vpop.f32.mrb[0].mxu0
    %v233 = vadd.f32 0.0, %v232
    %v234 = vpop.f32.mrb[0].mxu0
    %235 = vdwg.mxu0
    %v236 = vadd.f32 %v154, %v233
    %v237 = vtanh.pop %v236
    %v239 = vsel %vm162, %v237, 0
    %241 = vmatprep.subr.mxu0 0.0
    %242 = vmatpush1.msra.mxu0 %v62
    %243 = vmatprep.subr.mxu0 0.0
    %244 = vmatpush1.msra.mxu0 %v63
    %245 = vmatprep.subr.mxu0 0.0
    %246 = vmatpush1.msra.mxu0 %v64
    %247 = vmatprep.subr.mxu0 0.0
    %248 = vmatpush1.msra.mxu0 %v65
    %249 = vmatprep.subr.mxu0 0.0
    %250 = vmatpush1.msra.mxu0 0.0
    %251 = vmatprep.subr.mxu0 0.0
    %252 = vmatpush1.msra.mxu0 0.0
    %253 = vmatprep.subr.mxu0 0.0
    %254 = vmatpush1.msra.mxu0 0.0
    %255 = vmatprep.subr.mxu0 0.0
    %256 = vmatpush1.msra.mxu0 0.0
    %257 = vmatprep.subr.mxu0 0.0
    %258 = vmatpush1.msra.mxu0 0.0
    %259 = vmatprep.subr.mxu0 0.0
    %260 = vmatpush1.msra.mxu0 0.0
    %261 = vmatprep.subr.mxu0 0.0
    %262 = vmatpush1.msra.mxu0 0.0
    %263 = vmatprep.subr.mxu0 0.0
    %264 = vmatpush1.msra.mxu0 0.0
    %265 = vmatprep.subr.mxu0 0.0
    %266 = vmatpush1.msra.mxu0 0.0
    %267 = vmatprep.subr.mxu0 0.0
    %268 = vmatpush1.msra.mxu0 0.0
    %269 = vmatprep.subr.mxu0 0.0
    %270 = vmatpush1.msra.mxu0 0.0
    %271 = vmatprep.subr.mxu0 0.0
    %272 = vmatpush1.msra.mxu0 0.0
    %273 = vmatprep.subr.mxu0 0.0
    %274 = vmatpush1.msra.mxu0 0.0
    %275 = vmatprep.subr.mxu0 0.0
    %276 = vmatpush1.msra.mxu0 0.0
    %277 = vmatprep.subr.mxu0 0.0
    %278 = vmatpush1.msra.mxu0 0.0
    %279 = vmatprep.subr.mxu0 0.0
    %280 = vmatpush1.msra.mxu0 0.0
    %281 = vmatprep.subr.mxu0 0.0
    %282 = vmatpush1.msra.mxu0 0.0
    %283 = vmatprep.subr.mxu0 0.0
    %284 = vmatpush1.msra.mxu0 0.0
    %285 = vmatprep.subr.mxu0 0.0
    %286 = vmatpush1.msra.mxu0 0.0
    %287 = vmatprep.subr.mxu0 0.0
    %288 = vmatpush1.msra.mxu0 0.0
    %289 = vmatprep.subr.mxu0 0.0
    %290 = vmatpush1.msra.mxu0 0.0
    %291 = vmatprep.subr.mxu0 0.0
    %292 = vmatpush1.msra.mxu0 0.0
    %293 = vmatprep.subr.mxu0 0.0
    %294 = vmatpush1.msra.mxu0 0.0
    %295 = vmatprep.subr.mxu0 0.0
    %296 = vmatpush1.msra.mxu0 0.0
    %297 = vmatprep.subr.mxu0 0.0
    %298 = vmatpush1.msra.mxu0 0.0
    %299 = vmatprep.subr.mxu0 0.0
    %300 = vmatpush1.msra.mxu0 0.0
    %301 = vmatprep.subr.mxu0 0.0
    %302 = vmatpush1.msra.mxu0 0.0
    %303 = vmatprep.subr.mxu0 0.0
    %304 = vmatpush1.msra.mxu0 0.0
    %305 = vmatprep.mubr.f32.mxu0 0.0
    %306 = vmatmul.mubr.f32.gmra.mrb[0].mxu0 %v239
    %v307 = vpop.f32.mrb[0].mxu0
    %v308 = vadd.f32 0.0, %v307
    %v309 = vpop.f32.mrb[0].mxu0
    %310 = vdwg.mxu0
    %v312 = vrot.slane %v308, 6
    %v314 = vadd.f32 %v154, %v312
    %v315 = vtanh.pop %v314
    %v317 = vlaneseq
    %v318 = vshrl.u32 %v317, 7
    %v319 = vsub.s32 0, %v318
    %v320 = vrot.slane %v71, %v319
    %322 = vmatprep.subr.mxu0 0.0
    %323 = vmatpush1.msra.mxu0 %v58
    %324 = vmatprep.subr.mxu0 0.0
    %325 = vmatpush1.msra.mxu0 %v59
    %326 = vmatprep.subr.mxu0 0.0
    %327 = vmatpush1.msra.mxu0 %v60
    %328 = vmatprep.subr.mxu0 0.0
    %329 = vmatpush1.msra.mxu0 %v61
    %330 = vmatprep.subr.mxu0 0.0
    %331 = vmatpush1.msra.mxu0 0.0
    %332 = vmatprep.subr.mxu0 0.0
    %333 = vmatpush1.msra.mxu0 0.0
    %334 = vmatprep.subr.mxu0 0.0
    %335 = vmatpush1.msra.mxu0 0.0
    %336 = vmatprep.subr.mxu0 0.0
    %337 = vmatpush1.msra.mxu0 0.0
    %338 = vmatprep.subr.mxu0 0.0
    %339 = vmatpush1.msra.mxu0 0.0
    %340 = vmatprep.subr.mxu0 0.0
    %341 = vmatpush1.msra.mxu0 0.0
    %342 = vmatprep.subr.mxu0 0.0
    %343 = vmatpush1.msra.mxu0 0.0
    %344 = vmatprep.subr.mxu0 0.0
    %345 = vmatpush1.msra.mxu0 0.0
    %346 = vmatprep.subr.mxu0 0.0
    %347 = vmatpush1.msra.mxu0 0.0
    %348 = vmatprep.subr.mxu0 0.0
    %349 = vmatpush1.msra.mxu0 0.0
    %350 = vmatprep.subr.mxu0 0.0
    %351 = vmatpush1.msra.mxu0 0.0
    %352 = vmatprep.subr.mxu0 0.0
    %353 = vmatpush1.msra.mxu0 0.0
    %354 = vmatprep.subr.mxu0 0.0
    %355 = vmatpush1.msra.mxu0 0.0
    %356 = vmatprep.subr.mxu0 0.0
    %357 = vmatpush1.msra.mxu0 0.0
    %358 = vmatprep.subr.mxu0 0.0
    %359 = vmatpush1.msra.mxu0 0.0
    %360 = vmatprep.subr.mxu0 0.0
    %361 = vmatpush1.msra.mxu0 0.0
    %362 = vmatprep.subr.mxu0 0.0
    %363 = vmatpush1.msra.mxu0 0.0
    %364 = vmatprep.subr.mxu0 0.0
    %365 = vmatpush1.msra.mxu0 0.0
    %366 = vmatprep.subr.mxu0 0.0
    %367 = vmatpush1.msra.mxu0 0.0
    %368 = vmatprep.subr.mxu0 0.0
    %369 = vmatpush1.msra.mxu0 0.0
    %370 = vmatprep.subr.mxu0 0.0
    %371 = vmatpush1.msra.mxu0 0.0
    %372 = vmatprep.subr.mxu0 0.0
    %373 = vmatpush1.msra.mxu0 0.0
    %374 = vmatprep.subr.mxu0 0.0
    %375 = vmatpush1.msra.mxu0 0.0
    %376 = vmatprep.subr.mxu0 0.0
    %377 = vmatpush1.msra.mxu0 0.0
    %378 = vmatprep.subr.mxu0 0.0
    %379 = vmatpush1.msra.mxu0 0.0
    %380 = vmatprep.subr.mxu0 0.0
    %381 = vmatpush1.msra.mxu0 0.0
    %382 = vmatprep.subr.mxu0 0.0
    %383 = vmatpush1.msra.mxu0 0.0
    %384 = vmatprep.subr.mxu0 0.0
    %385 = vmatpush1.msra.mxu0 0.0
    %386 = vmatprep.mubr.f32.mxu0 0.0
    %387 = vmatmul.mubr.f32.gmra.mrb[0].mxu0 %v239
    %v388 = vpop.f32.mrb[0].mxu0
    %v389 = vadd.f32 %v320, %v388
    %v390 = vpop.f32.mrb[0].mxu0
    %391 = vdwg.mxu0
    %392 = vmatprep.subr.mxu0 0.0
    %393 = vmatpush1.msra.mxu0 %v66
    %394 = vmatprep.subr.mxu0 0.0
    %395 = vmatpush1.msra.mxu0 %v67
    %396 = vmatprep.subr.mxu0 0.0
    %397 = vmatpush1.msra.mxu0 %v68
    %398 = vmatprep.subr.mxu0 0.0
    %399 = vmatpush1.msra.mxu0 %v69
    %400 = vmatprep.subr.mxu0 0.0
    %401 = vmatpush1.msra.mxu0 0.0
    %402 = vmatprep.subr.mxu0 0.0
    %403 = vmatpush1.msra.mxu0 0.0
    %404 = vmatprep.subr.mxu0 0.0
    %405 = vmatpush1.msra.mxu0 0.0
    %406 = vmatprep.subr.mxu0 0.0
    %407 = vmatpush1.msra.mxu0 0.0
    %408 = vmatprep.subr.mxu0 0.0
    %409 = vmatpush1.msra.mxu0 0.0
    %410 = vmatprep.subr.mxu0 0.0
    %411 = vmatpush1.msra.mxu0 0.0
    %412 = vmatprep.subr.mxu0 0.0
    %413 = vmatpush1.msra.mxu0 0.0
    %414 = vmatprep.subr.mxu0 0.0
    %415 = vmatpush1.msra.mxu0 0.0
    %416 = vmatprep.subr.mxu0 0.0
    %417 = vmatpush1.msra.mxu0 0.0
    %418 = vmatprep.subr.mxu0 0.0
    %419 = vmatpush1.msra.mxu0 0.0
    %420 = vmatprep.subr.mxu0 0.0
    %421 = vmatpush1.msra.mxu0 0.0
    %422 = vmatprep.subr.mxu0 0.0
    %423 = vmatpush1.msra.mxu0 0.0
    %424 = vmatprep.subr.mxu0 0.0
    %425 = vmatpush1.msra.mxu0 0.0
    %426 = vmatprep.subr.mxu0 0.0
    %427 = vmatpush1.msra.mxu0 0.0
    %428 = vmatprep.subr.mxu0 0.0
    %429 = vmatpush1.msra.mxu0 0.0
    %430 = vmatprep.subr.mxu0 0.0
    %431 = vmatpush1.msra.mxu0 0.0
    %432 = vmatprep.subr.mxu0 0.0
    %433 = vmatpush1.msra.mxu0 0.0
    %434 = vmatprep.subr.mxu0 0.0
    %435 = vmatpush1.msra.mxu0 0.0
    %436 = vmatprep.subr.mxu0 0.0
    %437 = vmatpush1.msra.mxu0 0.0
    %438 = vmatprep.subr.mxu0 0.0
    %439 = vmatpush1.msra.mxu0 0.0
    %440 = vmatprep.subr.mxu0 0.0
    %441 = vmatpush1.msra.mxu0 0.0
    %442 = vmatprep.subr.mxu0 0.0
    %443 = vmatpush1.msra.mxu0 0.0
    %444 = vmatprep.subr.mxu0 0.0
    %445 = vmatpush1.msra.mxu0 0.0
    %446 = vmatprep.subr.mxu0 0.0
    %447 = vmatpush1.msra.mxu0 0.0
    %448 = vmatprep.subr.mxu0 0.0
    %449 = vmatpush1.msra.mxu0 0.0
    %450 = vmatprep.subr.mxu0 0.0
    %451 = vmatpush1.msra.mxu0 0.0
    %452 = vmatprep.subr.mxu0 0.0
    %453 = vmatpush1.msra.mxu0 0.0
    %454 = vmatprep.subr.mxu0 0.0
    %455 = vmatpush1.msra.mxu0 0.0
    %456 = vmatprep.mubr.f32.mxu0 0.0
    %457 = vmatmul.mubr.f32.gmra.mrb[0].mxu0 %v164
    %v458 = vpop.f32.mrb[0].mxu0
    %v459 = vadd.f32 0.0, %v458
    %v460 = vpop.f32.mrb[0].mxu0
    %461 = vdwg.mxu0
    %v462 = vadd.f32 %v389, %v459
    %v463 = vtanh.pop %v462
    %v465 = vrot.slane %v315, 2
    %v466 = vsel %vm162, %v465, 0
    %468 = vmatprep.subr.mxu0 0.0
    %469 = vmatpush1.msra.mxu0 %v62
    %470 = vmatprep.subr.mxu0 0.0
    %471 = vmatpush1.msra.mxu0 %v63
    %472 = vmatprep.subr.mxu0 0.0
    %473 = vmatpush1.msra.mxu0 %v64
    %474 = vmatprep.subr.mxu0 0.0
    %475 = vmatpush1.msra.mxu0 %v65
    %476 = vmatprep.subr.mxu0 0.0
    %477 = vmatpush1.msra.mxu0 0.0
    %478 = vmatprep.subr.mxu0 0.0
    %479 = vmatpush1.msra.mxu0 0.0
    %480 = vmatprep.subr.mxu0 0.0
    %481 = vmatpush1.msra.mxu0 0.0
    %482 = vmatprep.subr.mxu0 0.0
    %483 = vmatpush1.msra.mxu0 0.0
    %484 = vmatprep.subr.mxu0 0.0
    %485 = vmatpush1.msra.mxu0 0.0
    %486 = vmatprep.subr.mxu0 0.0
    %487 = vmatpush1.msra.mxu0 0.0
    %488 = vmatprep.subr.mxu0 0.0
    %489 = vmatpush1.msra.mxu0 0.0
    %490 = vmatprep.subr.mxu0 0.0
    %491 = vmatpush1.msra.mxu0 0.0
    %492 = vmatprep.subr.mxu0 0.0
    %493 = vmatpush1.msra.mxu0 0.0
    %494 = vmatprep.subr.mxu0 0.0
    %495 = vmatpush1.msra.mxu0 0.0
    %496 = vmatprep.subr.mxu0 0.0
    %497 = vmatpush1.msra.mxu0 0.0
    %498 = vmatprep.subr.mxu0 0.0
    %499 = vmatpush1.msra.mxu0 0.0
    %500 = vmatprep.subr.mxu0 0.0
    %501 = vmatpush1.msra.mxu0 0.0
    %502 = vmatprep.subr.mxu0 0.0
    %503 = vmatpush1.msra.mxu0 0.0
    %504 = vmatprep.subr.mxu0 0.0
    %505 = vmatpush1.msra.mxu0 0.0
    %506 = vmatprep.subr.mxu0 0.0
    %507 = vmatpush1.msra.mxu0 0.0
    %508 = vmatprep.subr.mxu0 0.0
    %509 = vmatpush1.msra.mxu0 0.0
    %510 = vmatprep.subr.mxu0 0.0
    %511 = vmatpush1.msra.mxu0 0.0
    %512 = vmatprep.subr.mxu0 0.0
    %513 = vmatpush1.msra.mxu0 0.0
    %514 = vmatprep.subr.mxu0 0.0
    %515 = vmatpush1.msra.mxu0 0.0
    %516 = vmatprep.subr.mxu0 0.0
    %517 = vmatpush1.msra.mxu0 0.0
    %518 = vmatprep.subr.mxu0 0.0
    %519 = vmatpush1.msra.mxu0 0.0
    %520 = vmatprep.subr.mxu0 0.0
    %521 = vmatpush1.msra.mxu0 0.0
    %522 = vmatprep.subr.mxu0 0.0
    %523 = vmatpush1.msra.mxu0 0.0
    %524 = vmatprep.subr.mxu0 0.0
    %525 = vmatpush1.msra.mxu0 0.0
    %526 = vmatprep.subr.mxu0 0.0
    %527 = vmatpush1.msra.mxu0 0.0
    %528 = vmatprep.subr.mxu0 0.0
    %529 = vmatpush1.msra.mxu0 0.0
    %530 = vmatprep.subr.mxu0 0.0
    %531 = vmatpush1.msra.mxu0 0.0
    %532 = vmatprep.mubr.f32.mxu0 0.0
    %533 = vmatmul.mubr.f32.gmra.mrb[0].mxu0 %v466
    %v534 = vpop.f32.mrb[0].mxu0
    %v535 = vadd.f32 0.0, %v534
    %v536 = vpop.f32.mrb[0].mxu0
    %537 = vdwg.mxu0
    %v539 = vrot.slane %v535, 4
    %v541 = vadd.f32 %v154, %v539
    %v542 = vtanh.pop %v541
    %543 = vmatprep.subr.mxu0 0.0
    %544 = vmatpush1.msra.mxu0 %v58
    %545 = vmatprep.subr.mxu0 0.0
    %546 = vmatpush1.msra.mxu0 %v59
    %547 = vmatprep.subr.mxu0 0.0
    %548 = vmatpush1.msra.mxu0 %v60
    %549 = vmatprep.subr.mxu0 0.0
    %550 = vmatpush1.msra.mxu0 %v61
    %551 = vmatprep.subr.mxu0 0.0
    %552 = vmatpush1.msra.mxu0 0.0
    %553 = vmatprep.subr.mxu0 0.0
    %554 = vmatpush1.msra.mxu0 0.0
    %555 = vmatprep.subr.mxu0 0.0
    %556 = vmatpush1.msra.mxu0 0.0
    %557 = vmatprep.subr.mxu0 0.0
    %558 = vmatpush1.msra.mxu0 0.0
    %559 = vmatprep.subr.mxu0 0.0
    %560 = vmatpush1.msra.mxu0 0.0
    %561 = vmatprep.subr.mxu0 0.0
    %562 = vmatpush1.msra.mxu0 0.0
    %563 = vmatprep.subr.mxu0 0.0
    %564 = vmatpush1.msra.mxu0 0.0
    %565 = vmatprep.subr.mxu0 0.0
    %566 = vmatpush1.msra.mxu0 0.0
    %567 = vmatprep.subr.mxu0 0.0
    %568 = vmatpush1.msra.mxu0 0.0
    %569 = vmatprep.subr.mxu0 0.0
    %570 = vmatpush1.msra.mxu0 0.0
    %571 = vmatprep.subr.mxu0 0.0
    %572 = vmatpush1.msra.mxu0 0.0
    %573 = vmatprep.subr.mxu0 0.0
    %574 = vmatpush1.msra.mxu0 0.0
    %575 = vmatprep.subr.mxu0 0.0
    %576 = vmatpush1.msra.mxu0 0.0
    %577 = vmatprep.subr.mxu0 0.0
    %578 = vmatpush1.msra.mxu0 0.0
    %579 = vmatprep.subr.mxu0 0.0
    %580 = vmatpush1.msra.mxu0 0.0
    %581 = vmatprep.subr.mxu0 0.0
    %582 = vmatpush1.msra.mxu0 0.0
    %583 = vmatprep.subr.mxu0 0.0
    %584 = vmatpush1.msra.mxu0 0.0
    %585 = vmatprep.subr.mxu0 0.0
    %586 = vmatpush1.msra.mxu0 0.0
    %587 = vmatprep.subr.mxu0 0.0
    %588 = vmatpush1.msra.mxu0 0.0
    %589 = vmatprep.subr.mxu0 0.0
    %590 = vmatpush1.msra.mxu0 0.0
    %591 = vmatprep.subr.mxu0 0.0
    %592 = vmatpush1.msra.mxu0 0.0
    %593 = vmatprep.subr.mxu0 0.0
    %594 = vmatpush1.msra.mxu0 0.0
    %595 = vmatprep.subr.mxu0 0.0
    %596 = vmatpush1.msra.mxu0 0.0
    %597 = vmatprep.subr.mxu0 0.0
    %598 = vmatpush1.msra.mxu0 0.0
    %599 = vmatprep.subr.mxu0 0.0
    %600 = vmatpush1.msra.mxu0 0.0
    %601 = vmatprep.subr.mxu0 0.0
    %602 = vmatpush1.msra.mxu0 0.0
    %603 = vmatprep.subr.mxu0 0.0
    %604 = vmatpush1.msra.mxu0 0.0
    %605 = vmatprep.subr.mxu0 0.0
    %606 = vmatpush1.msra.mxu0 0.0
    %607 = vmatprep.mubr.f32.mxu0 0.0
    %608 = vmatmul.mubr.f32.gmra.mrb[0].mxu0 %v466
    %v609 = vpop.f32.mrb[0].mxu0
    %v610 = vadd.f32 %v320, %v609
    %v611 = vpop.f32.mrb[0].mxu0
    %612 = vdwg.mxu0
    %v614 = vsel %vm162, %v463, 0
    %616 = vmatprep.subr.mxu0 0.0
    %617 = vmatpush1.msra.mxu0 %v66
    %618 = vmatprep.subr.mxu0 0.0
    %619 = vmatpush1.msra.mxu0 %v67
    %620 = vmatprep.subr.mxu0 0.0
    %621 = vmatpush1.msra.mxu0 %v68
    %622 = vmatprep.subr.mxu0 0.0
    %623 = vmatpush1.msra.mxu0 %v69
    %624 = vmatprep.subr.mxu0 0.0
    %625 = vmatpush1.msra.mxu0 0.0
    %626 = vmatprep.subr.mxu0 0.0
    %627 = vmatpush1.msra.mxu0 0.0
    %628 = vmatprep.subr.mxu0 0.0
    %629 = vmatpush1.msra.mxu0 0.0
    %630 = vmatprep.subr.mxu0 0.0
    %631 = vmatpush1.msra.mxu0 0.0
    %632 = vmatprep.subr.mxu0 0.0
    %633 = vmatpush1.msra.mxu0 0.0
    %634 = vmatprep.subr.mxu0 0.0
    %635 = vmatpush1.msra.mxu0 0.0
    %636 = vmatprep.subr.mxu0 0.0
    %637 = vmatpush1.msra.mxu0 0.0
    %638 = vmatprep.subr.mxu0 0.0
    %639 = vmatpush1.msra.mxu0 0.0
    %640 = vmatprep.subr.mxu0 0.0
    %641 = vmatpush1.msra.mxu0 0.0
    %642 = vmatprep.subr.mxu0 0.0
    %643 = vmatpush1.msra.mxu0 0.0
    %644 = vmatprep.subr.mxu0 0.0
    %645 = vmatpush1.msra.mxu0 0.0
    %646 = vmatprep.subr.mxu0 0.0
    %647 = vmatpush1.msra.mxu0 0.0
    %648 = vmatprep.subr.mxu0 0.0
    %649 = vmatpush1.msra.mxu0 0.0
    %650 = vmatprep.subr.mxu0 0.0
    %651 = vmatpush1.msra.mxu0 0.0
    %652 = vmatprep.subr.mxu0 0.0
    %653 = vmatpush1.msra.mxu0 0.0
    %654 = vmatprep.subr.mxu0 0.0
    %655 = vmatpush1.msra.mxu0 0.0
    %656 = vmatprep.subr.mxu0 0.0
    %657 = vmatpush1.msra.mxu0 0.0
    %658 = vmatprep.subr.mxu0 0.0
    %659 = vmatpush1.msra.mxu0 0.0
    %660 = vmatprep.subr.mxu0 0.0
    %661 = vmatpush1.msra.mxu0 0.0
    %662 = vmatprep.subr.mxu0 0.0
    %663 = vmatpush1.msra.mxu0 0.0
    %664 = vmatprep.subr.mxu0 0.0
    %665 = vmatpush1.msra.mxu0 0.0
    %666 = vmatprep.subr.mxu0 0.0
    %667 = vmatpush1.msra.mxu0 0.0
    %668 = vmatprep.subr.mxu0 0.0
    %669 = vmatpush1.msra.mxu0 0.0
    %670 = vmatprep.subr.mxu0 0.0
    %671 = vmatpush1.msra.mxu0 0.0
    %672 = vmatprep.subr.mxu0 0.0
    %673 = vmatpush1.msra.mxu0 0.0
    %674 = vmatprep.subr.mxu0 0.0
    %675 = vmatpush1.msra.mxu0 0.0
    %676 = vmatprep.subr.mxu0 0.0
    %677 = vmatpush1.msra.mxu0 0.0
    %678 = vmatprep.subr.mxu0 0.0
    %679 = vmatpush1.msra.mxu0 0.0
    %680 = vmatprep.mubr.f32.mxu0 0.0
    %681 = vmatmul.mubr.f32.gmra.mrb[0].mxu0 %v614
    %v682 = vpop.f32.mrb[0].mxu0
    %v683 = vadd.f32 0.0, %v682
    %v684 = vpop.f32.mrb[0].mxu0
    %685 = vdwg.mxu0
    %v686 = vadd.f32 %v610, %v683
    %v687 = vtanh.pop %v686
    %v689 = vrot.slane %v542, 4
    %v690 = vsel %vm162, %v689, 0
    %692 = vmatprep.subr.mxu0 0.0
    %693 = vmatpush1.msra.mxu0 %v62
    %694 = vmatprep.subr.mxu0 0.0
    %695 = vmatpush1.msra.mxu0 %v63
    %696 = vmatprep.subr.mxu0 0.0
    %697 = vmatpush1.msra.mxu0 %v64
    %698 = vmatprep.subr.mxu0 0.0
    %699 = vmatpush1.msra.mxu0 %v65
    %700 = vmatprep.subr.mxu0 0.0
    %701 = vmatpush1.msra.mxu0 0.0
    %702 = vmatprep.subr.mxu0 0.0
    %703 = vmatpush1.msra.mxu0 0.0
    %704 = vmatprep.subr.mxu0 0.0
    %705 = vmatpush1.msra.mxu0 0.0
    %706 = vmatprep.subr.mxu0 0.0
    %707 = vmatpush1.msra.mxu0 0.0
    %708 = vmatprep.subr.mxu0 0.0
    %709 = vmatpush1.msra.mxu0 0.0
    %710 = vmatprep.subr.mxu0 0.0
    %711 = vmatpush1.msra.mxu0 0.0
    %712 = vmatprep.subr.mxu0 0.0
    %713 = vmatpush1.msra.mxu0 0.0
    %714 = vmatprep.subr.mxu0 0.0
    %715 = vmatpush1.msra.mxu0 0.0
    %716 = vmatprep.subr.mxu0 0.0
    %717 = vmatpush1.msra.mxu0 0.0
    %718 = vmatprep.subr.mxu0 0.0
    %719 = vmatpush1.msra.mxu0 0.0
    %720 = vmatprep.subr.mxu0 0.0
    %721 = vmatpush1.msra.mxu0 0.0
    %722 = vmatprep.subr.mxu0 0.0
    %723 = vmatpush1.msra.mxu0 0.0
    %724 = vmatprep.subr.mxu0 0.0
    %725 = vmatpush1.msra.mxu0 0.0
    %726 = vmatprep.subr.mxu0 0.0
    %727 = vmatpush1.msra.mxu0 0.0
    %728 = vmatprep.subr.mxu0 0.0
    %729 = vmatpush1.msra.mxu0 0.0
    %730 = vmatprep.subr.mxu0 0.0
    %731 = vmatpush1.msra.mxu0 0.0
    %732 = vmatprep.subr.mxu0 0.0
    %733 = vmatpush1.msra.mxu0 0.0
    %734 = vmatprep.subr.mxu0 0.0
    %735 = vmatpush1.msra.mxu0 0.0
    %736 = vmatprep.subr.mxu0 0.0
    %737 = vmatpush1.msra.mxu0 0.0
    %738 = vmatprep.subr.mxu0 0.0
    %739 = vmatpush1.msra.mxu0 0.0
    %740 = vmatprep.subr.mxu0 0.0
    %741 = vmatpush1.msra.mxu0 0.0
    %742 = vmatprep.subr.mxu0 0.0
    %743 = vmatpush1.msra.mxu0 0.0
    %744 = vmatprep.subr.mxu0 0.0
    %745 = vmatpush1.msra.mxu0 0.0
    %746 = vmatprep.subr.mxu0 0.0
    %747 = vmatpush1.msra.mxu0 0.0
    %748 = vmatprep.subr.mxu0 0.0
    %749 = vmatpush1.msra.mxu0 0.0
    %750 = vmatprep.subr.mxu0 0.0
    %751 = vmatpush1.msra.mxu0 0.0
    %752 = vmatprep.subr.mxu0 0.0
    %753 = vmatpush1.msra.mxu0 0.0
    %754 = vmatprep.subr.mxu0 0.0
    %755 = vmatpush1.msra.mxu0 0.0
    %756 = vmatprep.mubr.f32.mxu0 0.0
    %757 = vmatmul.mubr.f32.gmra.mrb[0].mxu0 %v690
    %v758 = vpop.f32.mrb[0].mxu0
    %v759 = vadd.f32 0.0, %v758
    %v760 = vpop.f32.mrb[0].mxu0
    %761 = vdwg.mxu0
    %v763 = vrot.slane %v759, 2
    %v765 = vadd.f32 %v154, %v763
    %v766 = vtanh.pop %v765
    %767 = vmatprep.subr.mxu0 0.0
    %768 = vmatpush1.msra.mxu0 %v58
    %769 = vmatprep.subr.mxu0 0.0
    %770 = vmatpush1.msra.mxu0 %v59
    %771 = vmatprep.subr.mxu0 0.0
    %772 = vmatpush1.msra.mxu0 %v60
    %773 = vmatprep.subr.mxu0 0.0
    %774 = vmatpush1.msra.mxu0 %v61
    %775 = vmatprep.subr.mxu0 0.0
    %776 = vmatpush1.msra.mxu0 0.0
    %777 = vmatprep.subr.mxu0 0.0
    %778 = vmatpush1.msra.mxu0 0.0
    %779 = vmatprep.subr.mxu0 0.0
    %780 = vmatpush1.msra.mxu0 0.0
    %781 = vmatprep.subr.mxu0 0.0
    %782 = vmatpush1.msra.mxu0 0.0
    %783 = vmatprep.subr.mxu0 0.0
    %784 = vmatpush1.msra.mxu0 0.0
    %785 = vmatprep.subr.mxu0 0.0
    %786 = vmatpush1.msra.mxu0 0.0
    %787 = vmatprep.subr.mxu0 0.0
    %788 = vmatpush1.msra.mxu0 0.0
    %789 = vmatprep.subr.mxu0 0.0
    %790 = vmatpush1.msra.mxu0 0.0
    %791 = vmatprep.subr.mxu0 0.0
    %792 = vmatpush1.msra.mxu0 0.0
    %793 = vmatprep.subr.mxu0 0.0
    %794 = vmatpush1.msra.mxu0 0.0
    %795 = vmatprep.subr.mxu0 0.0
    %796 = vmatpush1.msra.mxu0 0.0
    %797 = vmatprep.subr.mxu0 0.0
    %798 = vmatpush1.msra.mxu0 0.0
    %799 = vmatprep.subr.mxu0 0.0
    %800 = vmatpush1.msra.mxu0 0.0
    %801 = vmatprep.subr.mxu0 0.0
    %802 = vmatpush1.msra.mxu0 0.0
    %803 = vmatprep.subr.mxu0 0.0
    %804 = vmatpush1.msra.mxu0 0.0
    %805 = vmatprep.subr.mxu0 0.0
    %806 = vmatpush1.msra.mxu0 0.0
    %807 = vmatprep.subr.mxu0 0.0
    %808 = vmatpush1.msra.mxu0 0.0
    %809 = vmatprep.subr.mxu0 0.0
    %810 = vmatpush1.msra.mxu0 0.0
    %811 = vmatprep.subr.mxu0 0.0
    %812 = vmatpush1.msra.mxu0 0.0
    %813 = vmatprep.subr.mxu0 0.0
    %814 = vmatpush1.msra.mxu0 0.0
    %815 = vmatprep.subr.mxu0 0.0
    %816 = vmatpush1.msra.mxu0 0.0
    %817 = vmatprep.subr.mxu0 0.0
    %818 = vmatpush1.msra.mxu0 0.0
    %819 = vmatprep.subr.mxu0 0.0
    %820 = vmatpush1.msra.mxu0 0.0
    %821 = vmatprep.subr.mxu0 0.0
    %822 = vmatpush1.msra.mxu0 0.0
    %823 = vmatprep.subr.mxu0 0.0
    %824 = vmatpush1.msra.mxu0 0.0
    %825 = vmatprep.subr.mxu0 0.0
    %826 = vmatpush1.msra.mxu0 0.0
    %827 = vmatprep.subr.mxu0 0.0
    %828 = vmatpush1.msra.mxu0 0.0
    %829 = vmatprep.subr.mxu0 0.0
    %830 = vmatpush1.msra.mxu0 0.0
    %831 = vmatprep.mubr.f32.mxu0 0.0
    %832 = vmatmul.mubr.f32.gmra.mrb[0].mxu0 %v690
    %v833 = vpop.f32.mrb[0].mxu0
    %v834 = vadd.f32 %v320, %v833
    %v835 = vpop.f32.mrb[0].mxu0
    %836 = vdwg.mxu0
    %v838 = vsel %vm162, %v687, 0
    %840 = vmatprep.subr.mxu0 0.0
    %841 = vmatpush1.msra.mxu0 %v66
    %842 = vmatprep.subr.mxu0 0.0
    %843 = vmatpush1.msra.mxu0 %v67
    %844 = vmatprep.subr.mxu0 0.0
    %845 = vmatpush1.msra.mxu0 %v68
    %846 = vmatprep.subr.mxu0 0.0
    %847 = vmatpush1.msra.mxu0 %v69
    %848 = vmatprep.subr.mxu0 0.0
    %849 = vmatpush1.msra.mxu0 0.0
    %850 = vmatprep.subr.mxu0 0.0
    %851 = vmatpush1.msra.mxu0 0.0
    %852 = vmatprep.subr.mxu0 0.0
    %853 = vmatpush1.msra.mxu0 0.0
    %854 = vmatprep.subr.mxu0 0.0
    %855 = vmatpush1.msra.mxu0 0.0
    %856 = vmatprep.subr.mxu0 0.0
    %857 = vmatpush1.msra.mxu0 0.0
    %858 = vmatprep.subr.mxu0 0.0
    %859 = vmatpush1.msra.mxu0 0.0
    %860 = vmatprep.subr.mxu0 0.0
    %861 = vmatpush1.msra.mxu0 0.0
    %862 = vmatprep.subr.mxu0 0.0
    %863 = vmatpush1.msra.mxu0 0.0
    %864 = vmatprep.subr.mxu0 0.0
    %865 = vmatpush1.msra.mxu0 0.0
    %866 = vmatprep.subr.mxu0 0.0
    %867 = vmatpush1.msra.mxu0 0.0
    %868 = vmatprep.subr.mxu0 0.0
    %869 = vmatpush1.msra.mxu0 0.0
    %870 = vmatprep.subr.mxu0 0.0
    %871 = vmatpush1.msra.mxu0 0.0
    %872 = vmatprep.subr.mxu0 0.0
    %873 = vmatpush1.msra.mxu0 0.0
    %874 = vmatprep.subr.mxu0 0.0
    %875 = vmatpush1.msra.mxu0 0.0
    %876 = vmatprep.subr.mxu0 0.0
    %877 = vmatpush1.msra.mxu0 0.0
    %878 = vmatprep.subr.mxu0 0.0
    %879 = vmatpush1.msra.mxu0 0.0
    %880 = vmatprep.subr.mxu0 0.0
    %881 = vmatpush1.msra.mxu0 0.0
    %882 = vmatprep.subr.mxu0 0.0
    %883 = vmatpush1.msra.mxu0 0.0
    %884 = vmatprep.subr.mxu0 0.0
    %885 = vmatpush1.msra.mxu0 0.0
    %886 = vmatprep.subr.mxu0 0.0
    %887 = vmatpush1.msra.mxu0 0.0
    %888 = vmatprep.subr.mxu0 0.0
    %889 = vmatpush1.msra.mxu0 0.0
    %890 = vmatprep.subr.mxu0 0.0
    %891 = vmatpush1.msra.mxu0 0.0
    %892 = vmatprep.subr.mxu0 0.0
    %893 = vmatpush1.msra.mxu0 0.0
    %894 = vmatprep.subr.mxu0 0.0
    %895 = vmatpush1.msra.mxu0 0.0
    %896 = vmatprep.subr.mxu0 0.0
    %897 = vmatpush1.msra.mxu0 0.0
    %898 = vmatprep.subr.mxu0 0.0
    %899 = vmatpush1.msra.mxu0 0.0
    %900 = vmatprep.subr.mxu0 0.0
    %901 = vmatpush1.msra.mxu0 0.0
    %902 = vmatprep.subr.mxu0 0.0
    %903 = vmatpush1.msra.mxu0 0.0
    %904 = vmatprep.mubr.f32.mxu0 0.0
    %905 = vmatmul.mubr.f32.gmra.mrb[0].mxu0 %v838
    %v906 = vpop.f32.mrb[0].mxu0
    %v907 = vadd.f32 0.0, %v906
    %v908 = vpop.f32.mrb[0].mxu0
    %909 = vdwg.mxu0
    %v910 = vadd.f32 %v834, %v907
    %v911 = vtanh.pop %v910
    %v913 = vrot.slane %v766, 6
    %v914 = vsel %vm162, %v913, 0
    %916 = vmatprep.subr.mxu0 0.0
    %917 = vmatpush1.msra.mxu0 %v62
    %918 = vmatprep.subr.mxu0 0.0
    %919 = vmatpush1.msra.mxu0 %v63
    %920 = vmatprep.subr.mxu0 0.0
    %921 = vmatpush1.msra.mxu0 %v64
    %922 = vmatprep.subr.mxu0 0.0
    %923 = vmatpush1.msra.mxu0 %v65
    %924 = vmatprep.subr.mxu0 0.0
    %925 = vmatpush1.msra.mxu0 0.0
    %926 = vmatprep.subr.mxu0 0.0
    %927 = vmatpush1.msra.mxu0 0.0
    %928 = vmatprep.subr.mxu0 0.0
    %929 = vmatpush1.msra.mxu0 0.0
    %930 = vmatprep.subr.mxu0 0.0
    %931 = vmatpush1.msra.mxu0 0.0
    %932 = vmatprep.subr.mxu0 0.0
    %933 = vmatpush1.msra.mxu0 0.0
    %934 = vmatprep.subr.mxu0 0.0
    %935 = vmatpush1.msra.mxu0 0.0
    %936 = vmatprep.subr.mxu0 0.0
    %937 = vmatpush1.msra.mxu0 0.0
    %938 = vmatprep.subr.mxu0 0.0
    %939 = vmatpush1.msra.mxu0 0.0
    %940 = vmatprep.subr.mxu0 0.0
    %941 = vmatpush1.msra.mxu0 0.0
    %942 = vmatprep.subr.mxu0 0.0
    %943 = vmatpush1.msra.mxu0 0.0
    %944 = vmatprep.subr.mxu0 0.0
    %945 = vmatpush1.msra.mxu0 0.0
    %946 = vmatprep.subr.mxu0 0.0
    %947 = vmatpush1.msra.mxu0 0.0
    %948 = vmatprep.subr.mxu0 0.0
    %949 = vmatpush1.msra.mxu0 0.0
    %950 = vmatprep.subr.mxu0 0.0
    %951 = vmatpush1.msra.mxu0 0.0
    %952 = vmatprep.subr.mxu0 0.0
    %953 = vmatpush1.msra.mxu0 0.0
    %954 = vmatprep.subr.mxu0 0.0
    %955 = vmatpush1.msra.mxu0 0.0
    %956 = vmatprep.subr.mxu0 0.0
    %957 = vmatpush1.msra.mxu0 0.0
    %958 = vmatprep.subr.mxu0 0.0
    %959 = vmatpush1.msra.mxu0 0.0
    %960 = vmatprep.subr.mxu0 0.0
    %961 = vmatpush1.msra.mxu0 0.0
    %962 = vmatprep.subr.mxu0 0.0
    %963 = vmatpush1.msra.mxu0 0.0
    %964 = vmatprep.subr.mxu0 0.0
    %965 = vmatpush1.msra.mxu0 0.0
    %966 = vmatprep.subr.mxu0 0.0
    %967 = vmatpush1.msra.mxu0 0.0
    %968 = vmatprep.subr.mxu0 0.0
    %969 = vmatpush1.msra.mxu0 0.0
    %970 = vmatprep.subr.mxu0 0.0
    %971 = vmatpush1.msra.mxu0 0.0
    %972 = vmatprep.subr.mxu0 0.0
    %973 = vmatpush1.msra.mxu0 0.0
    %974 = vmatprep.subr.mxu0 0.0
    %975 = vmatpush1.msra.mxu0 0.0
    %976 = vmatprep.subr.mxu0 0.0
    %977 = vmatpush1.msra.mxu0 0.0
    %978 = vmatprep.subr.mxu0 0.0
    %979 = vmatpush1.msra.mxu0 0.0
    %980 = vmatprep.mubr.f32.mxu0 0.0
    %981 = vmatmul.mubr.f32.gmra.mrb[0].mxu0 %v914
    %v982 = vpop.f32.mrb[0].mxu0
    %v983 = vadd.f32 0.0, %v982
    %v984 = vpop.f32.mrb[0].mxu0
    %985 = vdwg.mxu0
    %v986 = vadd.f32 %v159, %v983
    %v987 = vtanh.pop %v986
    %988 = vmatprep.subr.mxu0 0.0
    %989 = vmatpush1.msra.mxu0 %v58
    %990 = vmatprep.subr.mxu0 0.0
    %991 = vmatpush1.msra.mxu0 %v59
    %992 = vmatprep.subr.mxu0 0.0
    %993 = vmatpush1.msra.mxu0 %v60
    %994 = vmatprep.subr.mxu0 0.0
    %995 = vmatpush1.msra.mxu0 %v61
    %996 = vmatprep.subr.mxu0 0.0
    %997 = vmatpush1.msra.mxu0 0.0
    %998 = vmatprep.subr.mxu0 0.0
    %999 = vmatpush1.msra.mxu0 0.0
    %1000 = vmatprep.subr.mxu0 0.0
    %1001 = vmatpush1.msra.mxu0 0.0
    %1002 = vmatprep.subr.mxu0 0.0
    %1003 = vmatpush1.msra.mxu0 0.0
    %1004 = vmatprep.subr.mxu0 0.0
    %1005 = vmatpush1.msra.mxu0 0.0
    %1006 = vmatprep.subr.mxu0 0.0
    %1007 = vmatpush1.msra.mxu0 0.0
    %1008 = vmatprep.subr.mxu0 0.0
    %1009 = vmatpush1.msra.mxu0 0.0
    %1010 = vmatprep.subr.mxu0 0.0
    %1011 = vmatpush1.msra.mxu0 0.0
    %1012 = vmatprep.subr.mxu0 0.0
    %1013 = vmatpush1.msra.mxu0 0.0
    %1014 = vmatprep.subr.mxu0 0.0
    %1015 = vmatpush1.msra.mxu0 0.0
    %1016 = vmatprep.subr.mxu0 0.0
    %1017 = vmatpush1.msra.mxu0 0.0
    %1018 = vmatprep.subr.mxu0 0.0
    %1019 = vmatpush1.msra.mxu0 0.0
    %1020 = vmatprep.subr.mxu0 0.0
    %1021 = vmatpush1.msra.mxu0 0.0
    %1022 = vmatprep.subr.mxu0 0.0
    %1023 = vmatpush1.msra.mxu0 0.0
    %1024 = vmatprep.subr.mxu0 0.0
    %1025 = vmatpush1.msra.mxu0 0.0
    %1026 = vmatprep.subr.mxu0 0.0
    %1027 = vmatpush1.msra.mxu0 0.0
    %1028 = vmatprep.subr.mxu0 0.0
    %1029 = vmatpush1.msra.mxu0 0.0
    %1030 = vmatprep.subr.mxu0 0.0
    %1031 = vmatpush1.msra.mxu0 0.0
    %1032 = vmatprep.subr.mxu0 0.0
    %1033 = vmatpush1.msra.mxu0 0.0
    %1034 = vmatprep.subr.mxu0 0.0
    %1035 = vmatpush1.msra.mxu0 0.0
    %1036 = vmatprep.subr.mxu0 0.0
    %1037 = vmatpush1.msra.mxu0 0.0
    %1038 = vmatprep.subr.mxu0 0.0
    %1039 = vmatpush1.msra.mxu0 0.0
    %1040 = vmatprep.subr.mxu0 0.0
    %1041 = vmatpush1.msra.mxu0 0.0
    %1042 = vmatprep.subr.mxu0 0.0
    %1043 = vmatpush1.msra.mxu0 0.0
    %1044 = vmatprep.subr.mxu0 0.0
    %1045 = vmatpush1.msra.mxu0 0.0
    %1046 = vmatprep.subr.mxu0 0.0
    %1047 = vmatpush1.msra.mxu0 0.0
    %1048 = vmatprep.subr.mxu0 0.0
    %1049 = vmatpush1.msra.mxu0 0.0
    %1050 = vmatprep.subr.mxu0 0.0
    %1051 = vmatpush1.msra.mxu0 0.0
    %1052 = vmatprep.mubr.f32.mxu0 0.0
    %1053 = vmatmul.mubr.f32.gmra.mrb[0].mxu0 %v914
    %v1054 = vpop.f32.mrb[0].mxu0
    %v1055 = vadd.f32 %v320, %v1054
    %v1056 = vpop.f32.mrb[0].mxu0
    %1057 = vdwg.mxu0
    %v1059 = vsel %vm162, %v911, 0
    %1061 = vmatprep.subr.mxu0 0.0
    %1062 = vmatpush1.msra.mxu0 %v66
    %1063 = vmatprep.subr.mxu0 0.0
    %1064 = vmatpush1.msra.mxu0 %v67
    %1065 = vmatprep.subr.mxu0 0.0
    %1066 = vmatpush1.msra.mxu0 %v68
    %1067 = vmatprep.subr.mxu0 0.0
    %1068 = vmatpush1.msra.mxu0 %v69
    %1069 = vmatprep.subr.mxu0 0.0
    %1070 = vmatpush1.msra.mxu0 0.0
    %1071 = vmatprep.subr.mxu0 0.0
    %1072 = vmatpush1.msra.mxu0 0.0
    %1073 = vmatprep.subr.mxu0 0.0
    %1074 = vmatpush1.msra.mxu0 0.0
    %1075 = vmatprep.subr.mxu0 0.0
    %1076 = vmatpush1.msra.mxu0 0.0
    %1077 = vmatprep.subr.mxu0 0.0
    %1078 = vmatpush1.msra.mxu0 0.0
    %1079 = vmatprep.subr.mxu0 0.0
    %1080 = vmatpush1.msra.mxu0 0.0
    %1081 = vmatprep.subr.mxu0 0.0
    %1082 = vmatpush1.msra.mxu0 0.0
    %1083 = vmatprep.subr.mxu0 0.0
    %1084 = vmatpush1.msra.mxu0 0.0
    %1085 = vmatprep.subr.mxu0 0.0
    %1086 = vmatpush1.msra.mxu0 0.0
    %1087 = vmatprep.subr.mxu0 0.0
    %1088 = vmatpush1.msra.mxu0 0.0
    %1089 = vmatprep.subr.mxu0 0.0
    %1090 = vmatpush1.msra.mxu0 0.0
    %1091 = vmatprep.subr.mxu0 0.0
    %1092 = vmatpush1.msra.mxu0 0.0
    %1093 = vmatprep.subr.mxu0 0.0
    %1094 = vmatpush1.msra.mxu0 0.0
    %1095 = vmatprep.subr.mxu0 0.0
    %1096 = vmatpush1.msra.mxu0 0.0
    %1097 = vmatprep.subr.mxu0 0.0
    %1098 = vmatpush1.msra.mxu0 0.0
    %1099 = vmatprep.subr.mxu0 0.0
    %1100 = vmatpush1.msra.mxu0 0.0
    %1101 = vmatprep.subr.mxu0 0.0
    %1102 = vmatpush1.msra.mxu0 0.0
    %1103 = vmatprep.subr.mxu0 0.0
    %1104 = vmatpush1.msra.mxu0 0.0
    %1105 = vmatprep.subr.mxu0 0.0
    %1106 = vmatpush1.msra.mxu0 0.0
    %1107 = vmatprep.subr.mxu0 0.0
    %1108 = vmatpush1.msra.mxu0 0.0
    %1109 = vmatprep.subr.mxu0 0.0
    %1110 = vmatpush1.msra.mxu0 0.0
    %1111 = vmatprep.subr.mxu0 0.0
    %1112 = vmatpush1.msra.mxu0 0.0
    %1113 = vmatprep.subr.mxu0 0.0
    %1114 = vmatpush1.msra.mxu0 0.0
    %1115 = vmatprep.subr.mxu0 0.0
    %1116 = vmatpush1.msra.mxu0 0.0
    %1117 = vmatprep.subr.mxu0 0.0
    %1118 = vmatpush1.msra.mxu0 0.0
    %1119 = vmatprep.subr.mxu0 0.0
    %1120 = vmatpush1.msra.mxu0 0.0
    %1121 = vmatprep.subr.mxu0 0.0
    %1122 = vmatpush1.msra.mxu0 0.0
    %1123 = vmatprep.subr.mxu0 0.0
    %1124 = vmatpush1.msra.mxu0 0.0
    %1125 = vmatprep.mubr.f32.mxu0 0.0
    %1126 = vmatmul.mubr.f32.gmra.mrb[0].mxu0 %v1059
    %v1127 = vpop.f32.mrb[0].mxu0
    %v1128 = vadd.f32 0.0, %v1127
    %v1129 = vpop.f32.mrb[0].mxu0
    %1130 = vdwg.mxu0
    %v1131 = vadd.f32 %v1055, %v1128
    %v1132 = vtanh.pop %v1131
    %v1134 = vsel %vm162, %v987, 0
    %1136 = vmatprep.subr.mxu0 0.0
    %1137 = vmatpush1.msra.mxu0 %v62
    %1138 = vmatprep.subr.mxu0 0.0
    %1139 = vmatpush1.msra.mxu0 %v63
    %1140 = vmatprep.subr.mxu0 0.0
    %1141 = vmatpush1.msra.mxu0 %v64
    %1142 = vmatprep.subr.mxu0 0.0
    %1143 = vmatpush1.msra.mxu0 %v65
    %1144 = vmatprep.subr.mxu0 0.0
    %1145 = vmatpush1.msra.mxu0 0.0
    %1146 = vmatprep.subr.mxu0 0.0
    %1147 = vmatpush1.msra.mxu0 0.0
    %1148 = vmatprep.subr.mxu0 0.0
    %1149 = vmatpush1.msra.mxu0 0.0
    %1150 = vmatprep.subr.mxu0 0.0
    %1151 = vmatpush1.msra.mxu0 0.0
    %1152 = vmatprep.subr.mxu0 0.0
    %1153 = vmatpush1.msra.mxu0 0.0
    %1154 = vmatprep.subr.mxu0 0.0
    %1155 = vmatpush1.msra.mxu0 0.0
    %1156 = vmatprep.subr.mxu0 0.0
    %1157 = vmatpush1.msra.mxu0 0.0
    %1158 = vmatprep.subr.mxu0 0.0
    %1159 = vmatpush1.msra.mxu0 0.0
    %1160 = vmatprep.subr.mxu0 0.0
    %1161 = vmatpush1.msra.mxu0 0.0
    %1162 = vmatprep.subr.mxu0 0.0
    %1163 = vmatpush1.msra.mxu0 0.0
    %1164 = vmatprep.subr.mxu0 0.0
    %1165 = vmatpush1.msra.mxu0 0.0
    %1166 = vmatprep.subr.mxu0 0.0
    %1167 = vmatpush1.msra.mxu0 0.0
    %1168 = vmatprep.subr.mxu0 0.0
    %1169 = vmatpush1.msra.mxu0 0.0
    %1170 = vmatprep.subr.mxu0 0.0
    %1171 = vmatpush1.msra.mxu0 0.0
    %1172 = vmatprep.subr.mxu0 0.0
    %1173 = vmatpush1.msra.mxu0 0.0
    %1174 = vmatprep.subr.mxu0 0.0
    %1175 = vmatpush1.msra.mxu0 0.0
    %1176 = vmatprep.subr.mxu0 0.0
    %1177 = vmatpush1.msra.mxu0 0.0
    %1178 = vmatprep.subr.mxu0 0.0
    %1179 = vmatpush1.msra.mxu0 0.0
    %1180 = vmatprep.subr.mxu0 0.0
    %1181 = vmatpush1.msra.mxu0 0.0
    %1182 = vmatprep.subr.mxu0 0.0
    %1183 = vmatpush1.msra.mxu0 0.0
    %1184 = vmatprep.subr.mxu0 0.0
    %1185 = vmatpush1.msra.mxu0 0.0
    %1186 = vmatprep.subr.mxu0 0.0
    %1187 = vmatpush1.msra.mxu0 0.0
    %1188 = vmatprep.subr.mxu0 0.0
    %1189 = vmatpush1.msra.mxu0 0.0
    %1190 = vmatprep.subr.mxu0 0.0
    %1191 = vmatpush1.msra.mxu0 0.0
    %1192 = vmatprep.subr.mxu0 0.0
    %1193 = vmatpush1.msra.mxu0 0.0
    %1194 = vmatprep.subr.mxu0 0.0
    %1195 = vmatpush1.msra.mxu0 0.0
    %1196 = vmatprep.subr.mxu0 0.0
    %1197 = vmatpush1.msra.mxu0 0.0
    %1198 = vmatprep.subr.mxu0 0.0
    %1199 = vmatpush1.msra.mxu0 0.0
    %1200 = vmatprep.mubr.f32.mxu0 0.0
    %1201 = vmatmul.mubr.f32.gmra.mrb[0].mxu0 %v1134
    %v1202 = vpop.f32.mrb[0].mxu0
    %v1203 = vadd.f32 0.0, %v1202
    %v1204 = vpop.f32.mrb[0].mxu0
    %1205 = vdwg.mxu0
    %v1207 = vrot.slane %v1203, 6
    %v1209 = vadd.f32 %v159, %v1207
    %v1210 = vtanh.pop %v1209
    %1211 = vmatprep.subr.mxu0 0.0
    %1212 = vmatpush1.msra.mxu0 %v58
    %1213 = vmatprep.subr.mxu0 0.0
    %1214 = vmatpush1.msra.mxu0 %v59
    %1215 = vmatprep.subr.mxu0 0.0
    %1216 = vmatpush1.msra.mxu0 %v60
    %1217 = vmatprep.subr.mxu0 0.0
    %1218 = vmatpush1.msra.mxu0 %v61
    %1219 = vmatprep.subr.mxu0 0.0
    %1220 = vmatpush1.msra.mxu0 0.0
    %1221 = vmatprep.subr.mxu0 0.0
    %1222 = vmatpush1.msra.mxu0 0.0
    %1223 = vmatprep.subr.mxu0 0.0
    %1224 = vmatpush1.msra.mxu0 0.0
    %1225 = vmatprep.subr.mxu0 0.0
    %1226 = vmatpush1.msra.mxu0 0.0
    %1227 = vmatprep.subr.mxu0 0.0
    %1228 = vmatpush1.msra.mxu0 0.0
    %1229 = vmatprep.subr.mxu0 0.0
    %1230 = vmatpush1.msra.mxu0 0.0
    %1231 = vmatprep.subr.mxu0 0.0
    %1232 = vmatpush1.msra.mxu0 0.0
    %1233 = vmatprep.subr.mxu0 0.0
    %1234 = vmatpush1.msra.mxu0 0.0
    %1235 = vmatprep.subr.mxu0 0.0
    %1236 = vmatpush1.msra.mxu0 0.0
    %1237 = vmatprep.subr.mxu0 0.0
    %1238 = vmatpush1.msra.mxu0 0.0
    %1239 = vmatprep.subr.mxu0 0.0
    %1240 = vmatpush1.msra.mxu0 0.0
    %1241 = vmatprep.subr.mxu0 0.0
    %1242 = vmatpush1.msra.mxu0 0.0
    %1243 = vmatprep.subr.mxu0 0.0
    %1244 = vmatpush1.msra.mxu0 0.0
    %1245 = vmatprep.subr.mxu0 0.0
    %1246 = vmatpush1.msra.mxu0 0.0
    %1247 = vmatprep.subr.mxu0 0.0
    %1248 = vmatpush1.msra.mxu0 0.0
    %1249 = vmatprep.subr.mxu0 0.0
    %1250 = vmatpush1.msra.mxu0 0.0
    %1251 = vmatprep.subr.mxu0 0.0
    %1252 = vmatpush1.msra.mxu0 0.0
    %1253 = vmatprep.subr.mxu0 0.0
    %1254 = vmatpush1.msra.mxu0 0.0
    %1255 = vmatprep.subr.mxu0 0.0
    %1256 = vmatpush1.msra.mxu0 0.0
    %1257 = vmatprep.subr.mxu0 0.0
    %1258 = vmatpush1.msra.mxu0 0.0
    %1259 = vmatprep.subr.mxu0 0.0
    %1260 = vmatpush1.msra.mxu0 0.0
    %1261 = vmatprep.subr.mxu0 0.0
    %1262 = vmatpush1.msra.mxu0 0.0
    %1263 = vmatprep.subr.mxu0 0.0
    %1264 = vmatpush1.msra.mxu0 0.0
    %1265 = vmatprep.subr.mxu0 0.0
    %1266 = vmatpush1.msra.mxu0 0.0
    %1267 = vmatprep.subr.mxu0 0.0
    %1268 = vmatpush1.msra.mxu0 0.0
    %1269 = vmatprep.subr.mxu0 0.0
    %1270 = vmatpush1.msra.mxu0 0.0
    %1271 = vmatprep.subr.mxu0 0.0
    %1272 = vmatpush1.msra.mxu0 0.0
    %1273 = vmatprep.subr.mxu0 0.0
    %1274 = vmatpush1.msra.mxu0 0.0
    %1275 = vmatprep.mubr.f32.mxu0 0.0
    %1276 = vmatmul.mubr.f32.gmra.mrb[0].mxu0 %v1134
    %v1277 = vpop.f32.mrb[0].mxu0
    %v1278 = vadd.f32 %v320, %v1277
    %v1279 = vpop.f32.mrb[0].mxu0
    %1280 = vdwg.mxu0
    %v1282 = vsel %vm162, %v1132, 0
    %1284 = vmatprep.subr.mxu0 0.0
    %1285 = vmatpush1.msra.mxu0 %v66
    %1286 = vmatprep.subr.mxu0 0.0
    %1287 = vmatpush1.msra.mxu0 %v67
    %1288 = vmatprep.subr.mxu0 0.0
    %1289 = vmatpush1.msra.mxu0 %v68
    %1290 = vmatprep.subr.mxu0 0.0
    %1291 = vmatpush1.msra.mxu0 %v69
    %1292 = vmatprep.subr.mxu0 0.0
    %1293 = vmatpush1.msra.mxu0 0.0
    %1294 = vmatprep.subr.mxu0 0.0
    %1295 = vmatpush1.msra.mxu0 0.0
    %1296 = vmatprep.subr.mxu0 0.0
    %1297 = vmatpush1.msra.mxu0 0.0
    %1298 = vmatprep.subr.mxu0 0.0
    %1299 = vmatpush1.msra.mxu0 0.0
    %1300 = vmatprep.subr.mxu0 0.0
    %1301 = vmatpush1.msra.mxu0 0.0
    %1302 = vmatprep.subr.mxu0 0.0
    %1303 = vmatpush1.msra.mxu0 0.0
    %1304 = vmatprep.subr.mxu0 0.0
    %1305 = vmatpush1.msra.mxu0 0.0
    %1306 = vmatprep.subr.mxu0 0.0
    %1307 = vmatpush1.msra.mxu0 0.0
    %1308 = vmatprep.subr.mxu0 0.0
    %1309 = vmatpush1.msra.mxu0 0.0
    %1310 = vmatprep.subr.mxu0 0.0
    %1311 = vmatpush1.msra.mxu0 0.0
    %1312 = vmatprep.subr.mxu0 0.0
    %1313 = vmatpush1.msra.mxu0 0.0
    %1314 = vmatprep.subr.mxu0 0.0
    %1315 = vmatpush1.msra.mxu0 0.0
    %1316 = vmatprep.subr.mxu0 0.0
    %1317 = vmatpush1.msra.mxu0 0.0
    %1318 = vmatprep.subr.mxu0 0.0
    %1319 = vmatpush1.msra.mxu0 0.0
    %1320 = vmatprep.subr.mxu0 0.0
    %1321 = vmatpush1.msra.mxu0 0.0
    %1322 = vmatprep.subr.mxu0 0.0
    %1323 = vmatpush1.msra.mxu0 0.0
    %1324 = vmatprep.subr.mxu0 0.0
    %1325 = vmatpush1.msra.mxu0 0.0
    %1326 = vmatprep.subr.mxu0 0.0
    %1327 = vmatpush1.msra.mxu0 0.0
    %1328 = vmatprep.subr.mxu0 0.0
    %1329 = vmatpush1.msra.mxu0 0.0
    %1330 = vmatprep.subr.mxu0 0.0
    %1331 = vmatpush1.msra.mxu0 0.0
    %1332 = vmatprep.subr.mxu0 0.0
    %1333 = vmatpush1.msra.mxu0 0.0
    %1334 = vmatprep.subr.mxu0 0.0
    %1335 = vmatpush1.msra.mxu0 0.0
    %1336 = vmatprep.subr.mxu0 0.0
    %1337 = vmatpush1.msra.mxu0 0.0
    %1338 = vmatprep.subr.mxu0 0.0
    %1339 = vmatpush1.msra.mxu0 0.0
    %1340 = vmatprep.subr.mxu0 0.0
    %1341 = vmatpush1.msra.mxu0 0.0
    %1342 = vmatprep.subr.mxu0 0.0
    %1343 = vmatpush1.msra.mxu0 0.0
    %1344 = vmatprep.subr.mxu0 0.0
    %1345 = vmatpush1.msra.mxu0 0.0
    %1346 = vmatprep.subr.mxu0 0.0
    %1347 = vmatpush1.msra.mxu0 0.0
    %1348 = vmatprep.mubr.f32.mxu0 0.0
    %1349 = vmatmul.mubr.f32.gmra.mrb[0].mxu0 %v1282
    %v1350 = vpop.f32.mrb[0].mxu0
    %v1351 = vadd.f32 0.0, %v1350
    %v1352 = vpop.f32.mrb[0].mxu0
    %1353 = vdwg.mxu0
    %v1354 = vadd.f32 %v1278, %v1351
    %v1355 = vtanh.pop %v1354
    %v1357 = vrot.slane %v1210, 2
    %v1358 = vsel %vm162, %v1357, 0
    %1360 = vmatprep.subr.mxu0 0.0
    %1361 = vmatpush1.msra.mxu0 %v62
    %1362 = vmatprep.subr.mxu0 0.0
    %1363 = vmatpush1.msra.mxu0 %v63
    %1364 = vmatprep.subr.mxu0 0.0
    %1365 = vmatpush1.msra.mxu0 %v64
    %1366 = vmatprep.subr.mxu0 0.0
    %1367 = vmatpush1.msra.mxu0 %v65
    %1368 = vmatprep.subr.mxu0 0.0
    %1369 = vmatpush1.msra.mxu0 0.0
    %1370 = vmatprep.subr.mxu0 0.0
    %1371 = vmatpush1.msra.mxu0 0.0
    %1372 = vmatprep.subr.mxu0 0.0
    %1373 = vmatpush1.msra.mxu0 0.0
    %1374 = vmatprep.subr.mxu0 0.0
    %1375 = vmatpush1.msra.mxu0 0.0
    %1376 = vmatprep.subr.mxu0 0.0
    %1377 = vmatpush1.msra.mxu0 0.0
    %1378 = vmatprep.subr.mxu0 0.0
    %1379 = vmatpush1.msra.mxu0 0.0
    %1380 = vmatprep.subr.mxu0 0.0
    %1381 = vmatpush1.msra.mxu0 0.0
    %1382 = vmatprep.subr.mxu0 0.0
    %1383 = vmatpush1.msra.mxu0 0.0
    %1384 = vmatprep.subr.mxu0 0.0
    %1385 = vmatpush1.msra.mxu0 0.0
    %1386 = vmatprep.subr.mxu0 0.0
    %1387 = vmatpush1.msra.mxu0 0.0
    %1388 = vmatprep.subr.mxu0 0.0
    %1389 = vmatpush1.msra.mxu0 0.0
    %1390 = vmatprep.subr.mxu0 0.0
    %1391 = vmatpush1.msra.mxu0 0.0
    %1392 = vmatprep.subr.mxu0 0.0
    %1393 = vmatpush1.msra.mxu0 0.0
    %1394 = vmatprep.subr.mxu0 0.0
    %1395 = vmatpush1.msra.mxu0 0.0
    %1396 = vmatprep.subr.mxu0 0.0
    %1397 = vmatpush1.msra.mxu0 0.0
    %1398 = vmatprep.subr.mxu0 0.0
    %1399 = vmatpush1.msra.mxu0 0.0
    %1400 = vmatprep.subr.mxu0 0.0
    %1401 = vmatpush1.msra.mxu0 0.0
    %1402 = vmatprep.subr.mxu0 0.0
    %1403 = vmatpush1.msra.mxu0 0.0
    %1404 = vmatprep.subr.mxu0 0.0
    %1405 = vmatpush1.msra.mxu0 0.0
    %1406 = vmatprep.subr.mxu0 0.0
    %1407 = vmatpush1.msra.mxu0 0.0
    %1408 = vmatprep.subr.mxu0 0.0
    %1409 = vmatpush1.msra.mxu0 0.0
    %1410 = vmatprep.subr.mxu0 0.0
    %1411 = vmatpush1.msra.mxu0 0.0
    %1412 = vmatprep.subr.mxu0 0.0
    %1413 = vmatpush1.msra.mxu0 0.0
    %1414 = vmatprep.subr.mxu0 0.0
    %1415 = vmatpush1.msra.mxu0 0.0
    %1416 = vmatprep.subr.mxu0 0.0
    %1417 = vmatpush1.msra.mxu0 0.0
    %1418 = vmatprep.subr.mxu0 0.0
    %1419 = vmatpush1.msra.mxu0 0.0
    %1420 = vmatprep.subr.mxu0 0.0
    %1421 = vmatpush1.msra.mxu0 0.0
    %1422 = vmatprep.subr.mxu0 0.0
    %1423 = vmatpush1.msra.mxu0 0.0
    %1424 = vmatprep.mubr.f32.mxu0 0.0
    %1425 = vmatmul.mubr.f32.gmra.mrb[0].mxu0 %v1358
    %v1426 = vpop.f32.mrb[0].mxu0
    %v1427 = vadd.f32 0.0, %v1426
    %v1428 = vpop.f32.mrb[0].mxu0
    %1429 = vdwg.mxu0
    %v1431 = vrot.slane %v1427, 4
    %v1433 = vadd.f32 %v159, %v1431
    %v1434 = vtanh.pop %v1433
    %1435 = vmatprep.subr.mxu0 0.0
    %1436 = vmatpush1.msra.mxu0 %v58
    %1437 = vmatprep.subr.mxu0 0.0
    %1438 = vmatpush1.msra.mxu0 %v59
    %1439 = vmatprep.subr.mxu0 0.0
    %1440 = vmatpush1.msra.mxu0 %v60
    %1441 = vmatprep.subr.mxu0 0.0
    %1442 = vmatpush1.msra.mxu0 %v61
    %1443 = vmatprep.subr.mxu0 0.0
    %1444 = vmatpush1.msra.mxu0 0.0
    %1445 = vmatprep.subr.mxu0 0.0
    %1446 = vmatpush1.msra.mxu0 0.0
    %1447 = vmatprep.subr.mxu0 0.0
    %1448 = vmatpush1.msra.mxu0 0.0
    %1449 = vmatprep.subr.mxu0 0.0
    %1450 = vmatpush1.msra.mxu0 0.0
    %1451 = vmatprep.subr.mxu0 0.0
    %1452 = vmatpush1.msra.mxu0 0.0
    %1453 = vmatprep.subr.mxu0 0.0
    %1454 = vmatpush1.msra.mxu0 0.0
    %1455 = vmatprep.subr.mxu0 0.0
    %1456 = vmatpush1.msra.mxu0 0.0
    %1457 = vmatprep.subr.mxu0 0.0
    %1458 = vmatpush1.msra.mxu0 0.0
    %1459 = vmatprep.subr.mxu0 0.0
    %1460 = vmatpush1.msra.mxu0 0.0
    %1461 = vmatprep.subr.mxu0 0.0
    %1462 = vmatpush1.msra.mxu0 0.0
    %1463 = vmatprep.subr.mxu0 0.0
    %1464 = vmatpush1.msra.mxu0 0.0
    %1465 = vmatprep.subr.mxu0 0.0
    %1466 = vmatpush1.msra.mxu0 0.0
    %1467 = vmatprep.subr.mxu0 0.0
    %1468 = vmatpush1.msra.mxu0 0.0
    %1469 = vmatprep.subr.mxu0 0.0
    %1470 = vmatpush1.msra.mxu0 0.0
    %1471 = vmatprep.subr.mxu0 0.0
    %1472 = vmatpush1.msra.mxu0 0.0
    %1473 = vmatprep.subr.mxu0 0.0
    %1474 = vmatpush1.msra.mxu0 0.0
    %1475 = vmatprep.subr.mxu0 0.0
    %1476 = vmatpush1.msra.mxu0 0.0
    %1477 = vmatprep.subr.mxu0 0.0
    %1478 = vmatpush1.msra.mxu0 0.0
    %1479 = vmatprep.subr.mxu0 0.0
    %1480 = vmatpush1.msra.mxu0 0.0
    %1481 = vmatprep.subr.mxu0 0.0
    %1482 = vmatpush1.msra.mxu0 0.0
    %1483 = vmatprep.subr.mxu0 0.0
    %1484 = vmatpush1.msra.mxu0 0.0
    %1485 = vmatprep.subr.mxu0 0.0
    %1486 = vmatpush1.msra.mxu0 0.0
    %1487 = vmatprep.subr.mxu0 0.0
    %1488 = vmatpush1.msra.mxu0 0.0
    %1489 = vmatprep.subr.mxu0 0.0
    %1490 = vmatpush1.msra.mxu0 0.0
    %1491 = vmatprep.subr.mxu0 0.0
    %1492 = vmatpush1.msra.mxu0 0.0
    %1493 = vmatprep.subr.mxu0 0.0
    %1494 = vmatpush1.msra.mxu0 0.0
    %1495 = vmatprep.subr.mxu0 0.0
    %1496 = vmatpush1.msra.mxu0 0.0
    %1497 = vmatprep.subr.mxu0 0.0
    %1498 = vmatpush1.msra.mxu0 0.0
    %1499 = vmatprep.mubr.f32.mxu0 0.0
    %1500 = vmatmul.mubr.f32.gmra.mrb[0].mxu0 %v1358
    %v1501 = vpop.f32.mrb[0].mxu0
    %v1502 = vadd.f32 %v320, %v1501
    %v1503 = vpop.f32.mrb[0].mxu0
    %1504 = vdwg.mxu0
    %v1506 = vsel %vm162, %v1355, 0
    %1508 = vmatprep.subr.mxu0 0.0
    %1509 = vmatpush1.msra.mxu0 %v66
    %1510 = vmatprep.subr.mxu0 0.0
    %1511 = vmatpush1.msra.mxu0 %v67
    %1512 = vmatprep.subr.mxu0 0.0
    %1513 = vmatpush1.msra.mxu0 %v68
    %1514 = vmatprep.subr.mxu0 0.0
    %1515 = vmatpush1.msra.mxu0 %v69
    %1516 = vmatprep.subr.mxu0 0.0
    %1517 = vmatpush1.msra.mxu0 0.0
    %1518 = vmatprep.subr.mxu0 0.0
    %1519 = vmatpush1.msra.mxu0 0.0
    %1520 = vmatprep.subr.mxu0 0.0
    %1521 = vmatpush1.msra.mxu0 0.0
    %1522 = vmatprep.subr.mxu0 0.0
    %1523 = vmatpush1.msra.mxu0 0.0
    %1524 = vmatprep.subr.mxu0 0.0
    %1525 = vmatpush1.msra.mxu0 0.0
    %1526 = vmatprep.subr.mxu0 0.0
    %1527 = vmatpush1.msra.mxu0 0.0
    %1528 = vmatprep.subr.mxu0 0.0
    %1529 = vmatpush1.msra.mxu0 0.0
    %1530 = vmatprep.subr.mxu0 0.0
    %1531 = vmatpush1.msra.mxu0 0.0
    %1532 = vmatprep.subr.mxu0 0.0
    %1533 = vmatpush1.msra.mxu0 0.0
    %1534 = vmatprep.subr.mxu0 0.0
    %1535 = vmatpush1.msra.mxu0 0.0
    %1536 = vmatprep.subr.mxu0 0.0
    %1537 = vmatpush1.msra.mxu0 0.0
    %1538 = vmatprep.subr.mxu0 0.0
    %1539 = vmatpush1.msra.mxu0 0.0
    %1540 = vmatprep.subr.mxu0 0.0
    %1541 = vmatpush1.msra.mxu0 0.0
    %1542 = vmatprep.subr.mxu0 0.0
    %1543 = vmatpush1.msra.mxu0 0.0
    %1544 = vmatprep.subr.mxu0 0.0
    %1545 = vmatpush1.msra.mxu0 0.0
    %1546 = vmatprep.subr.mxu0 0.0
    %1547 = vmatpush1.msra.mxu0 0.0
    %1548 = vmatprep.subr.mxu0 0.0
    %1549 = vmatpush1.msra.mxu0 0.0
    %1550 = vmatprep.subr.mxu0 0.0
    %1551 = vmatpush1.msra.mxu0 0.0
    %1552 = vmatprep.subr.mxu0 0.0
    %1553 = vmatpush1.msra.mxu0 0.0
    %1554 = vmatprep.subr.mxu0 0.0
    %1555 = vmatpush1.msra.mxu0 0.0
    %1556 = vmatprep.subr.mxu0 0.0
    %1557 = vmatpush1.msra.mxu0 0.0
    %1558 = vmatprep.subr.mxu0 0.0
    %1559 = vmatpush1.msra.mxu0 0.0
    %1560 = vmatprep.subr.mxu0 0.0
    %1561 = vmatpush1.msra.mxu0 0.0
    %1562 = vmatprep.subr.mxu0 0.0
    %1563 = vmatpush1.msra.mxu0 0.0
    %1564 = vmatprep.subr.mxu0 0.0
    %1565 = vmatpush1.msra.mxu0 0.0
    %1566 = vmatprep.subr.mxu0 0.0
    %1567 = vmatpush1.msra.mxu0 0.0
    %1568 = vmatprep.subr.mxu0 0.0
    %1569 = vmatpush1.msra.mxu0 0.0
    %1570 = vmatprep.subr.mxu0 0.0
    %1571 = vmatpush1.msra.mxu0 0.0
    %1572 = vmatprep.mubr.f32.mxu0 0.0
    %1573 = vmatmul.mubr.f32.gmra.mrb[0].mxu0 %v1506
    %v1574 = vpop.f32.mrb[0].mxu0
    %v1575 = vadd.f32 0.0, %v1574
    %v1576 = vpop.f32.mrb[0].mxu0
    %1577 = vdwg.mxu0
    %v1578 = vadd.f32 %v1502, %v1575
    %v1579 = vtanh.pop %v1578
    %v1581 = vrot.slane %v1434, 4
    %v1582 = vsel %vm162, %v1581, 0
    %1584 = vmatprep.subr.mxu0 0.0
    %1585 = vmatpush1.msra.mxu0 %v62
    %1586 = vmatprep.subr.mxu0 0.0
    %1587 = vmatpush1.msra.mxu0 %v63
    %1588 = vmatprep.subr.mxu0 0.0
    %1589 = vmatpush1.msra.mxu0 %v64
    %1590 = vmatprep.subr.mxu0 0.0
    %1591 = vmatpush1.msra.mxu0 %v65
    %1592 = vmatprep.subr.mxu0 0.0
    %1593 = vmatpush1.msra.mxu0 0.0
    %1594 = vmatprep.subr.mxu0 0.0
    %1595 = vmatpush1.msra.mxu0 0.0
    %1596 = vmatprep.subr.mxu0 0.0
    %1597 = vmatpush1.msra.mxu0 0.0
    %1598 = vmatprep.subr.mxu0 0.0
    %1599 = vmatpush1.msra.mxu0 0.0
    %1600 = vmatprep.subr.mxu0 0.0
    %1601 = vmatpush1.msra.mxu0 0.0
    %1602 = vmatprep.subr.mxu0 0.0
    %1603 = vmatpush1.msra.mxu0 0.0
    %1604 = vmatprep.subr.mxu0 0.0
    %1605 = vmatpush1.msra.mxu0 0.0
    %1606 = vmatprep.subr.mxu0 0.0
    %1607 = vmatpush1.msra.mxu0 0.0
    %1608 = vmatprep.subr.mxu0 0.0
    %1609 = vmatpush1.msra.mxu0 0.0
    %1610 = vmatprep.subr.mxu0 0.0
    %1611 = vmatpush1.msra.mxu0 0.0
    %1612 = vmatprep.subr.mxu0 0.0
    %1613 = vmatpush1.msra.mxu0 0.0
    %1614 = vmatprep.subr.mxu0 0.0
    %1615 = vmatpush1.msra.mxu0 0.0
    %1616 = vmatprep.subr.mxu0 0.0
    %1617 = vmatpush1.msra.mxu0 0.0
    %1618 = vmatprep.subr.mxu0 0.0
    %1619 = vmatpush1.msra.mxu0 0.0
    %1620 = vmatprep.subr.mxu0 0.0
    %1621 = vmatpush1.msra.mxu0 0.0
    %1622 = vmatprep.subr.mxu0 0.0
    %1623 = vmatpush1.msra.mxu0 0.0
    %1624 = vmatprep.subr.mxu0 0.0
    %1625 = vmatpush1.msra.mxu0 0.0
    %1626 = vmatprep.subr.mxu0 0.0
    %1627 = vmatpush1.msra.mxu0 0.0
    %1628 = vmatprep.subr.mxu0 0.0
    %1629 = vmatpush1.msra.mxu0 0.0
    %1630 = vmatprep.subr.mxu0 0.0
    %1631 = vmatpush1.msra.mxu0 0.0
    %1632 = vmatprep.subr.mxu0 0.0
    %1633 = vmatpush1.msra.mxu0 0.0
    %1634 = vmatprep.subr.mxu0 0.0
    %1635 = vmatpush1.msra.mxu0 0.0
    %1636 = vmatprep.subr.mxu0 0.0
    %1637 = vmatpush1.msra.mxu0 0.0
    %1638 = vmatprep.subr.mxu0 0.0
    %1639 = vmatpush1.msra.mxu0 0.0
    %1640 = vmatprep.subr.mxu0 0.0
    %1641 = vmatpush1.msra.mxu0 0.0
    %1642 = vmatprep.subr.mxu0 0.0
    %1643 = vmatpush1.msra.mxu0 0.0
    %1644 = vmatprep.subr.mxu0 0.0
    %1645 = vmatpush1.msra.mxu0 0.0
    %1646 = vmatprep.subr.mxu0 0.0
    %1647 = vmatpush1.msra.mxu0 0.0
    %1648 = vmatprep.mubr.f32.mxu0 0.0
    %1649 = vmatmul.mubr.f32.gmra.mrb[0].mxu0 %v1582
    %v1650 = vpop.f32.mrb[0].mxu0
    %v1651 = vadd.f32 0.0, %v1650
    %v1652 = vpop.f32.mrb[0].mxu0
    %1653 = vdwg.mxu0
    %v1655 = vrot.slane %v1651, 2
    %v1657 = vadd.f32 %v159, %v1655
    %v1658 = vtanh.pop %v1657
    %1659 = vmatprep.subr.mxu0 0.0
    %1660 = vmatpush1.msra.mxu0 %v58
    %1661 = vmatprep.subr.mxu0 0.0
    %1662 = vmatpush1.msra.mxu0 %v59
    %1663 = vmatprep.subr.mxu0 0.0
    %1664 = vmatpush1.msra.mxu0 %v60
    %1665 = vmatprep.subr.mxu0 0.0
    %1666 = vmatpush1.msra.mxu0 %v61
    %1667 = vmatprep.subr.mxu0 0.0
    %1668 = vmatpush1.msra.mxu0 0.0
    %1669 = vmatprep.subr.mxu0 0.0
    %1670 = vmatpush1.msra.mxu0 0.0
    %1671 = vmatprep.subr.mxu0 0.0
    %1672 = vmatpush1.msra.mxu0 0.0
    %1673 = vmatprep.subr.mxu0 0.0
    %1674 = vmatpush1.msra.mxu0 0.0
    %1675 = vmatprep.subr.mxu0 0.0
    %1676 = vmatpush1.msra.mxu0 0.0
    %1677 = vmatprep.subr.mxu0 0.0
    %1678 = vmatpush1.msra.mxu0 0.0
    %1679 = vmatprep.subr.mxu0 0.0
    %1680 = vmatpush1.msra.mxu0 0.0
    %1681 = vmatprep.subr.mxu0 0.0
    %1682 = vmatpush1.msra.mxu0 0.0
    %1683 = vmatprep.subr.mxu0 0.0
    %1684 = vmatpush1.msra.mxu0 0.0
    %1685 = vmatprep.subr.mxu0 0.0
    %1686 = vmatpush1.msra.mxu0 0.0
    %1687 = vmatprep.subr.mxu0 0.0
    %1688 = vmatpush1.msra.mxu0 0.0
    %1689 = vmatprep.subr.mxu0 0.0
    %1690 = vmatpush1.msra.mxu0 0.0
    %1691 = vmatprep.subr.mxu0 0.0
    %1692 = vmatpush1.msra.mxu0 0.0
    %1693 = vmatprep.subr.mxu0 0.0
    %1694 = vmatpush1.msra.mxu0 0.0
    %1695 = vmatprep.subr.mxu0 0.0
    %1696 = vmatpush1.msra.mxu0 0.0
    %1697 = vmatprep.subr.mxu0 0.0
    %1698 = vmatpush1.msra.mxu0 0.0
    %1699 = vmatprep.subr.mxu0 0.0
    %1700 = vmatpush1.msra.mxu0 0.0
    %1701 = vmatprep.subr.mxu0 0.0
    %1702 = vmatpush1.msra.mxu0 0.0
    %1703 = vmatprep.subr.mxu0 0.0
    %1704 = vmatpush1.msra.mxu0 0.0
    %1705 = vmatprep.subr.mxu0 0.0
    %1706 = vmatpush1.msra.mxu0 0.0
    %1707 = vmatprep.subr.mxu0 0.0
    %1708 = vmatpush1.msra.mxu0 0.0
    %1709 = vmatprep.subr.mxu0 0.0
    %1710 = vmatpush1.msra.mxu0 0.0
    %1711 = vmatprep.subr.mxu0 0.0
    %1712 = vmatpush1.msra.mxu0 0.0
    %1713 = vmatprep.subr.mxu0 0.0
    %1714 = vmatpush1.msra.mxu0 0.0
    %1715 = vmatprep.subr.mxu0 0.0
    %1716 = vmatpush1.msra.mxu0 0.0
    %1717 = vmatprep.subr.mxu0 0.0
    %1718 = vmatpush1.msra.mxu0 0.0
    %1719 = vmatprep.subr.mxu0 0.0
    %1720 = vmatpush1.msra.mxu0 0.0
    %1721 = vmatprep.subr.mxu0 0.0
    %1722 = vmatpush1.msra.mxu0 0.0
    %1723 = vmatprep.mubr.f32.mxu0 0.0
    %1724 = vmatmul.mubr.f32.gmra.mrb[0].mxu0 %v1582
    %v1725 = vpop.f32.mrb[0].mxu0
    %v1726 = vadd.f32 %v320, %v1725
    %v1727 = vpop.f32.mrb[0].mxu0
    %1728 = vdwg.mxu0
    %v1730 = vsel %vm162, %v1579, 0
    %1732 = vmatprep.subr.mxu0 0.0
    %1733 = vmatpush1.msra.mxu0 %v66
    %1734 = vmatprep.subr.mxu0 0.0
    %1735 = vmatpush1.msra.mxu0 %v67
    %1736 = vmatprep.subr.mxu0 0.0
    %1737 = vmatpush1.msra.mxu0 %v68
    %1738 = vmatprep.subr.mxu0 0.0
    %1739 = vmatpush1.msra.mxu0 %v69
    %1740 = vmatprep.subr.mxu0 0.0
    %1741 = vmatpush1.msra.mxu0 0.0
    %1742 = vmatprep.subr.mxu0 0.0
    %1743 = vmatpush1.msra.mxu0 0.0
    %1744 = vmatprep.subr.mxu0 0.0
    %1745 = vmatpush1.msra.mxu0 0.0
    %1746 = vmatprep.subr.mxu0 0.0
    %1747 = vmatpush1.msra.mxu0 0.0
    %1748 = vmatprep.subr.mxu0 0.0
    %1749 = vmatpush1.msra.mxu0 0.0
    %1750 = vmatprep.subr.mxu0 0.0
    %1751 = vmatpush1.msra.mxu0 0.0
    %1752 = vmatprep.subr.mxu0 0.0
    %1753 = vmatpush1.msra.mxu0 0.0
    %1754 = vmatprep.subr.mxu0 0.0
    %1755 = vmatpush1.msra.mxu0 0.0
    %1756 = vmatprep.subr.mxu0 0.0
    %1757 = vmatpush1.msra.mxu0 0.0
    %1758 = vmatprep.subr.mxu0 0.0
    %1759 = vmatpush1.msra.mxu0 0.0
    %1760 = vmatprep.subr.mxu0 0.0
    %1761 = vmatpush1.msra.mxu0 0.0
    %1762 = vmatprep.subr.mxu0 0.0
    %1763 = vmatpush1.msra.mxu0 0.0
    %1764 = vmatprep.subr.mxu0 0.0
    %1765 = vmatpush1.msra.mxu0 0.0
    %1766 = vmatprep.subr.mxu0 0.0
    %1767 = vmatpush1.msra.mxu0 0.0
    %1768 = vmatprep.subr.mxu0 0.0
    %1769 = vmatpush1.msra.mxu0 0.0
    %1770 = vmatprep.subr.mxu0 0.0
    %1771 = vmatpush1.msra.mxu0 0.0
    %1772 = vmatprep.subr.mxu0 0.0
    %1773 = vmatpush1.msra.mxu0 0.0
    %1774 = vmatprep.subr.mxu0 0.0
    %1775 = vmatpush1.msra.mxu0 0.0
    %1776 = vmatprep.subr.mxu0 0.0
    %1777 = vmatpush1.msra.mxu0 0.0
    %1778 = vmatprep.subr.mxu0 0.0
    %1779 = vmatpush1.msra.mxu0 0.0
    %1780 = vmatprep.subr.mxu0 0.0
    %1781 = vmatpush1.msra.mxu0 0.0
    %1782 = vmatprep.subr.mxu0 0.0
    %1783 = vmatpush1.msra.mxu0 0.0
    %1784 = vmatprep.subr.mxu0 0.0
    %1785 = vmatpush1.msra.mxu0 0.0
    %1786 = vmatprep.subr.mxu0 0.0
    %1787 = vmatpush1.msra.mxu0 0.0
    %1788 = vmatprep.subr.mxu0 0.0
    %1789 = vmatpush1.msra.mxu0 0.0
    %1790 = vmatprep.subr.mxu0 0.0
    %1791 = vmatpush1.msra.mxu0 0.0
    %1792 = vmatprep.subr.mxu0 0.0
    %1793 = vmatpush1.msra.mxu0 0.0
    %1794 = vmatprep.subr.mxu0 0.0
    %1795 = vmatpush1.msra.mxu0 0.0
    %1796 = vmatprep.mubr.f32.mxu0 0.0
    %1797 = vmatmul.mubr.f32.gmra.mrb[0].mxu0 %v1730
    %v1798 = vpop.f32.mrb[0].mxu0
    %v1799 = vadd.f32 0.0, %v1798
    %v1800 = vpop.f32.mrb[0].mxu0
    %1801 = vdwg.mxu0
    %v1802 = vadd.f32 %v1726, %v1799
    %v1803 = vtanh.pop %v1802
    %v1805 = vrot.slane %v1658, 6
    %v1806 = vsel %vm162, %v1805, 0
    %1808 = vmatprep.subr.mxu0 0.0
    %1809 = vmatpush1.msra.mxu0 %v58
    %1810 = vmatprep.subr.mxu0 0.0
    %1811 = vmatpush1.msra.mxu0 %v59
    %1812 = vmatprep.subr.mxu0 0.0
    %1813 = vmatpush1.msra.mxu0 %v60
    %1814 = vmatprep.subr.mxu0 0.0
    %1815 = vmatpush1.msra.mxu0 %v61
    %1816 = vmatprep.subr.mxu0 0.0
    %1817 = vmatpush1.msra.mxu0 0.0
    %1818 = vmatprep.subr.mxu0 0.0
    %1819 = vmatpush1.msra.mxu0 0.0
    %1820 = vmatprep.subr.mxu0 0.0
    %1821 = vmatpush1.msra.mxu0 0.0
    %1822 = vmatprep.subr.mxu0 0.0
    %1823 = vmatpush1.msra.mxu0 0.0
    %1824 = vmatprep.subr.mxu0 0.0
    %1825 = vmatpush1.msra.mxu0 0.0
    %1826 = vmatprep.subr.mxu0 0.0
    %1827 = vmatpush1.msra.mxu0 0.0
    %1828 = vmatprep.subr.mxu0 0.0
    %1829 = vmatpush1.msra.mxu0 0.0
    %1830 = vmatprep.subr.mxu0 0.0
    %1831 = vmatpush1.msra.mxu0 0.0
    %1832 = vmatprep.subr.mxu0 0.0
    %1833 = vmatpush1.msra.mxu0 0.0
    %1834 = vmatprep.subr.mxu0 0.0
    %1835 = vmatpush1.msra.mxu0 0.0
    %1836 = vmatprep.subr.mxu0 0.0
    %1837 = vmatpush1.msra.mxu0 0.0
    %1838 = vmatprep.subr.mxu0 0.0
    %1839 = vmatpush1.msra.mxu0 0.0
    %1840 = vmatprep.subr.mxu0 0.0
    %1841 = vmatpush1.msra.mxu0 0.0
    %1842 = vmatprep.subr.mxu0 0.0
    %1843 = vmatpush1.msra.mxu0 0.0
    %1844 = vmatprep.subr.mxu0 0.0
    %1845 = vmatpush1.msra.mxu0 0.0
    %1846 = vmatprep.subr.mxu0 0.0
    %1847 = vmatpush1.msra.mxu0 0.0
    %1848 = vmatprep.subr.mxu0 0.0
    %1849 = vmatpush1.msra.mxu0 0.0
    %1850 = vmatprep.subr.mxu0 0.0
    %1851 = vmatpush1.msra.mxu0 0.0
    %1852 = vmatprep.subr.mxu0 0.0
    %1853 = vmatpush1.msra.mxu0 0.0
    %1854 = vmatprep.subr.mxu0 0.0
    %1855 = vmatpush1.msra.mxu0 0.0
    %1856 = vmatprep.subr.mxu0 0.0
    %1857 = vmatpush1.msra.mxu0 0.0
    %1858 = vmatprep.subr.mxu0 0.0
    %1859 = vmatpush1.msra.mxu0 0.0
    %1860 = vmatprep.subr.mxu0 0.0
    %1861 = vmatpush1.msra.mxu0 0.0
    %1862 = vmatprep.subr.mxu0 0.0
    %1863 = vmatpush1.msra.mxu0 0.0
    %1864 = vmatprep.subr.mxu0 0.0
    %1865 = vmatpush1.msra.mxu0 0.0
    %1866 = vmatprep.subr.mxu0 0.0
    %1867 = vmatpush1.msra.mxu0 0.0
    %1868 = vmatprep.subr.mxu0 0.0
    %1869 = vmatpush1.msra.mxu0 0.0
    %1870 = vmatprep.subr.mxu0 0.0
    %1871 = vmatpush1.msra.mxu0 0.0
    %1872 = vmatprep.mubr.f32.mxu0 0.0
    %1873 = vmatmul.mubr.f32.gmra.mrb[0].mxu0 %v1806
    %v1874 = vpop.f32.mrb[0].mxu0
    %v1875 = vadd.f32 %v320, %v1874
    %v1876 = vpop.f32.mrb[0].mxu0
    %1877 = vdwg.mxu0
    %v1879 = vsel %vm162, %v1803, 0
    %1881 = vmatprep.subr.mxu0 0.0
    %1882 = vmatpush1.msra.mxu0 %v66
    %1883 = vmatprep.subr.mxu0 0.0
    %1884 = vmatpush1.msra.mxu0 %v67
    %1885 = vmatprep.subr.mxu0 0.0
    %1886 = vmatpush1.msra.mxu0 %v68
    %1887 = vmatprep.subr.mxu0 0.0
    %1888 = vmatpush1.msra.mxu0 %v69
    %1889 = vmatprep.subr.mxu0 0.0
    %1890 = vmatpush1.msra.mxu0 0.0
    %1891 = vmatprep.subr.mxu0 0.0
    %1892 = vmatpush1.msra.mxu0 0.0
    %1893 = vmatprep.subr.mxu0 0.0
    %1894 = vmatpush1.msra.mxu0 0.0
    %1895 = vmatprep.subr.mxu0 0.0
    %1896 = vmatpush1.msra.mxu0 0.0
    %1897 = vmatprep.subr.mxu0 0.0
    %1898 = vmatpush1.msra.mxu0 0.0
    %1899 = vmatprep.subr.mxu0 0.0
    %1900 = vmatpush1.msra.mxu0 0.0
    %1901 = vmatprep.subr.mxu0 0.0
    %1902 = vmatpush1.msra.mxu0 0.0
    %1903 = vmatprep.subr.mxu0 0.0
    %1904 = vmatpush1.msra.mxu0 0.0
    %1905 = vmatprep.subr.mxu0 0.0
    %1906 = vmatpush1.msra.mxu0 0.0
    %1907 = vmatprep.subr.mxu0 0.0
    %1908 = vmatpush1.msra.mxu0 0.0
    %1909 = vmatprep.subr.mxu0 0.0
    %1910 = vmatpush1.msra.mxu0 0.0
    %1911 = vmatprep.subr.mxu0 0.0
    %1912 = vmatpush1.msra.mxu0 0.0
    %1913 = vmatprep.subr.mxu0 0.0
    %1914 = vmatpush1.msra.mxu0 0.0
    %1915 = vmatprep.subr.mxu0 0.0
    %1916 = vmatpush1.msra.mxu0 0.0
    %1917 = vmatprep.subr.mxu0 0.0
    %1918 = vmatpush1.msra.mxu0 0.0
    %1919 = vmatprep.subr.mxu0 0.0
    %1920 = vmatpush1.msra.mxu0 0.0
    %1921 = vmatprep.subr.mxu0 0.0
    %1922 = vmatpush1.msra.mxu0 0.0
    %1923 = vmatprep.subr.mxu0 0.0
    %1924 = vmatpush1.msra.mxu0 0.0
    %1925 = vmatprep.subr.mxu0 0.0
    %1926 = vmatpush1.msra.mxu0 0.0
    %1927 = vmatprep.subr.mxu0 0.0
    %1928 = vmatpush1.msra.mxu0 0.0
    %1929 = vmatprep.subr.mxu0 0.0
    %1930 = vmatpush1.msra.mxu0 0.0
    %1931 = vmatprep.subr.mxu0 0.0
    %1932 = vmatpush1.msra.mxu0 0.0
    %1933 = vmatprep.subr.mxu0 0.0
    %1934 = vmatpush1.msra.mxu0 0.0
    %1935 = vmatprep.subr.mxu0 0.0
    %1936 = vmatpush1.msra.mxu0 0.0
    %1937 = vmatprep.subr.mxu0 0.0
    %1938 = vmatpush1.msra.mxu0 0.0
    %1939 = vmatprep.subr.mxu0 0.0
    %1940 = vmatpush1.msra.mxu0 0.0
    %1941 = vmatprep.subr.mxu0 0.0
    %1942 = vmatpush1.msra.mxu0 0.0
    %1943 = vmatprep.subr.mxu0 0.0
    %1944 = vmatpush1.msra.mxu0 0.0
    %1945 = vmatprep.mubr.f32.mxu0 0.0
    %1946 = vmatmul.mubr.f32.gmra.mrb[0].mxu0 %v1879
    %v1947 = vpop.f32.mrb[0].mxu0
    %v1948 = vadd.f32 0.0, %v1947
    %v1949 = vpop.f32.mrb[0].mxu0
    %1950 = vdwg.mxu0
    %v1951 = vadd.f32 %v1875, %v1948
    %v1952 = vtanh.pop %v1951
    %v1953 = vld [vmem:[%s7] sm:$0xff]
    %v1954 = vld [vmem:[%s7 + $0x8] sm:$0xff]
    %v1955 = vld [vmem:[%s7 + $0x10] sm:$0xff]
    %v1956 = vld [vmem:[%s7 + $0x18] sm:$0xff]
    %v1957 = vld [vmem:[#allocation5] sm:$0x1]
    %v1959 = vlaneseq
    %v1960 = vshrl.u32 %v1959, 7
    %v1961 = vsub.s32 0, %v1960
    %v1962 = vrot.slane %v1957, %v1961
    %v1965 = vsel %vm162, %v1952, 0
    %1967 = vmatprep.subr.mxu0 0.0
    %1968 = vmatpush1.msra.mxu0 %v1953
    %1969 = vmatprep.subr.mxu0 0.0
    %1970 = vmatpush1.msra.mxu0 %v1954
    %1971 = vmatprep.subr.mxu0 0.0
    %1972 = vmatpush1.msra.mxu0 %v1955
    %1973 = vmatprep.subr.mxu0 0.0
    %1974 = vmatpush1.msra.mxu0 %v1956
    %1975 = vmatprep.subr.mxu0 0.0
    %1976 = vmatpush1.msra.mxu0 0.0
    %1977 = vmatprep.subr.mxu0 0.0
    %1978 = vmatpush1.msra.mxu0 0.0
    %1979 = vmatprep.subr.mxu0 0.0
    %1980 = vmatpush1.msra.mxu0 0.0
    %1981 = vmatprep.subr.mxu0 0.0
    %1982 = vmatpush1.msra.mxu0 0.0
    %1983 = vmatprep.subr.mxu0 0.0
    %1984 = vmatpush1.msra.mxu0 0.0
    %1985 = vmatprep.subr.mxu0 0.0
    %1986 = vmatpush1.msra.mxu0 0.0
    %1987 = vmatprep.subr.mxu0 0.0
    %1988 = vmatpush1.msra.mxu0 0.0
    %1989 = vmatprep.subr.mxu0 0.0
    %1990 = vmatpush1.msra.mxu0 0.0
    %1991 = vmatprep.subr.mxu0 0.0
    %1992 = vmatpush1.msra.mxu0 0.0
    %1993 = vmatprep.subr.mxu0 0.0
    %1994 = vmatpush1.msra.mxu0 0.0
    %1995 = vmatprep.subr.mxu0 0.0
    %1996 = vmatpush1.msra.mxu0 0.0
    %1997 = vmatprep.subr.mxu0 0.0
    %1998 = vmatpush1.msra.mxu0 0.0
    %1999 = vmatprep.subr.mxu0 0.0
    %2000 = vmatpush1.msra.mxu0 0.0
    %2001 = vmatprep.subr.mxu0 0.0
    %2002 = vmatpush1.msra.mxu0 0.0
    %2003 = vmatprep.subr.mxu0 0.0
    %2004 = vmatpush1.msra.mxu0 0.0
    %2005 = vmatprep.subr.mxu0 0.0
    %2006 = vmatpush1.msra.mxu0 0.0
    %2007 = vmatprep.subr.mxu0 0.0
    %2008 = vmatpush1.msra.mxu0 0.0
    %2009 = vmatprep.subr.mxu0 0.0
    %2010 = vmatpush1.msra.mxu0 0.0
    %2011 = vmatprep.subr.mxu0 0.0
    %2012 = vmatpush1.msra.mxu0 0.0
    %2013 = vmatprep.subr.mxu0 0.0
    %2014 = vmatpush1.msra.mxu0 0.0
    %2015 = vmatprep.subr.mxu0 0.0
    %2016 = vmatpush1.msra.mxu0 0.0
    %2017 = vmatprep.subr.mxu0 0.0
    %2018 = vmatpush1.msra.mxu0 0.0
    %2019 = vmatprep.subr.mxu0 0.0
    %2020 = vmatpush1.msra.mxu0 0.0
    %2021 = vmatprep.subr.mxu0 0.0
    %2022 = vmatpush1.msra.mxu0 0.0
    %2023 = vmatprep.subr.mxu0 0.0
    %2024 = vmatpush1.msra.mxu0 0.0
    %2025 = vmatprep.subr.mxu0 0.0
    %2026 = vmatpush1.msra.mxu0 0.0
    %2027 = vmatprep.subr.mxu0 0.0
    %2028 = vmatpush1.msra.mxu0 0.0
    %2029 = vmatprep.subr.mxu0 0.0
    %2030 = vmatpush1.msra.mxu0 0.0
    %2031 = vmatprep.mubr.f32.mxu0 0.0
    %2032 = vmatmul.mubr.f32.gmra.mrb[0].mxu0 %v1965
    %v2033 = vpop.f32.mrb[0].mxu0
    %v2034 = vadd.f32 %v1962, %v2033
    %v2035 = vpop.f32.mrb[0].mxu0
    %2036 = vdwg.mxu0
    %vm2037 = vcmask 25600
    %2038 = vst.msk [vmem:[#allocation7] sm:$0x3] %vm2037, %v2034
    // Predicated region
    $region46: #{simple_rnn_forward.1} parent=1 // pred_check
      _
    $region47: #{simple_rnn_forward.1} parent=1 // pred_check_branch
      %2040 = sbr.rel (0) target = $region49
    $region48: #{simple_rnn_forward.1} parent=1 // pred_region
      %s2042 = ssub.s32 32, 32
      %2043 = vsyncadd [#allocation4], %s2042
      %s2045 = sshll.u32 [#allocation7], 4
      %s2046 = int_to_ptr.vmem [resolvable:$true] %s2045
      %2048 = dma.vmem_to_hbm [thread:$0]  %s2046, 32, %s9, [#allocation4]
    $region49: #{simple_rnn_forward.1} parent=1 // pred_fallthru
      _
    // Predicated region
    $region50: #{simple_rnn_forward.1} parent=1 // pred_check
      _
    $region51: #{simple_rnn_forward.1} parent=1 // pred_check_branch
      %2050 = sbr.rel (0) target = $region53
    $region52: #{simple_rnn_forward.1} parent=1 // pred_region
      %2051 = dma.done [#allocation4], 32
    $region53: #{simple_rnn_forward.1} parent=1 // pred_fallthru
      _
    %2052 = vsyncpa [#allocation3], 1
    %2053 = vsyncpa [#allocation6], 1
    %2054 = vsyncpa [#allocation4], 1

</llo_original>
